<compile_context>
chip_gen: v5e
topology: v5e:2x2
jax: 0.10.0
libtpu: 0.0.40
codegen_flags: <defaults>
</compile_context>

<pallas_src>
import jax
import jax.numpy as jnp
from jax.experimental import pallas as pl
from jax.experimental.pallas import tpu as pltpu


def make_dense_kernel(xp_ref, w_ref, a_ref, o_ref):
    # xp_ref: (Bt, H+2, W+2, Cin)  spatially pre-padded NHWC input block
    # w_ref : (9*Cin, G)           im2col weight, row = (dy*3 + dx)*Cin + c
    # a_ref : (1, 1)               PReLU slope (single shared parameter)
    # o_ref : (Bt*H*W, Cin + G)    flattened NHWC output rows for this block
    Bt, Hp, Wp, Cin = xp_ref.shape
    H, W = Hp - 2, Wp - 2
    N, Cout = o_ref.shape

    xp = xp_ref[...]                                    # whole padded block

    # im2col: nine shifted windows concatenated on the lane axis -> (N, 9*Cin).
    cols = [xp[:, dy:dy + H, dx:dx + W, :].reshape(N, Cin)
            for dy in range(3) for dx in range(3)]      # static unroll, 9 taps
    patches = jnp.concatenate(cols, axis=-1).astype(jnp.float32)

    # Single MXU matmul, f32 accumulation.
    acc = jnp.dot(patches, w_ref[...], preferred_element_type=jnp.float32)

    # PReLU with one shared slope: max(x, 0) + a * min(x, 0).
    a = a_ref[...]                                      # (1, 1), broadcasts
    act = jnp.maximum(acc, 0.0) + a * jnp.minimum(acc, 0.0)

    # Channel concat with the un-padded input (center tap == x) + one store.
    x_center = cols[4].astype(jnp.float32)              # tap (dy=1, dx=1)
    out2d = jnp.concatenate([x_center, act], axis=-1)   # (N, Cin + G)
    o_ref[...] = out2d.astype(o_ref.dtype)


def make_dense(x_nchw, w_oihw, prelu_a, *, vmem_block_budget=8 * 1024 * 1024):
    """Forward of make_dense: concat(x, PReLU(conv3x3(x, bias=False))) on channels.

    x_nchw:  (B, Cin, H, W)
    w_oihw:  (G, Cin, 3, 3)  PyTorch Conv2d weight (bias=False)
    prelu_a: scalar          PyTorch nn.PReLU() single weight
    returns: (B, Cin + G, H, W) in x's dtype
    """
    B, Cin, H, W = x_nchw.shape
    G = w_oihw.shape[0]
    Cout = Cin + G
    dtype = x_nchw.dtype
    itemsize = jnp.dtype(dtype).itemsize

    # NHWC + zero spatial padding (conv padding = 1).  In a real model keep
    # activations NHWC end-to-end so these wrapper transposes/pads disappear.
    x_nhwc = jnp.transpose(x_nchw, (0, 2, 3, 1))
    xp = jnp.pad(x_nhwc, ((0, 0), (1, 1), (1, 1), (0, 0)))

    # (G, Cin, 3, 3) -> (3, 3, Cin, G) -> (9*Cin, G); row = (dy*3 + dx)*Cin + c.
    w_mat = jnp.transpose(w_oihw, (2, 3, 1, 0)).reshape(9 * Cin, G)
    w_mat = w_mat.astype(jnp.float32)
    a_arr = jnp.asarray(prelu_a, jnp.float32).reshape(1, 1)

    # Batches per grid step: largest divisor of B whose double-buffered blocks
    # (+ the f32 im2col intermediate) fit the budget while keeping >= 2 grid
    # steps when B >= 2 (megacore: a 1-long grid idles one TensorCore).
    def footprint(bt):
        in_b = bt * (H + 2) * (W + 2) * Cin * itemsize
        col_b = bt * H * W * 9 * Cin * 4
        out_b = bt * H * W * Cout * itemsize
        return 2 * (in_b + out_b) + col_b

    bt = 1
    for cand in range(1, B + 1):
        if B % cand:
            continue
        if footprint(cand) > vmem_block_budget:
            continue
        if B >= 2 and B // cand < 2:
            continue
        bt = cand
    grid = (B // bt,)

    cost = pl.CostEstimate(
        flops=2 * B * H * W * 9 * Cin * G + 3 * B * H * W * G,
        transcendentals=0,
        bytes_accessed=int(xp.size * itemsize
                           + B * H * W * Cout * itemsize
                           + w_mat.size * 4),
    )

    out_flat = pl.pallas_call(
        make_dense_kernel,
        out_shape=jax.ShapeDtypeStruct((B * H * W, Cout), dtype),
        grid_spec=pltpu.PrefetchScalarGridSpec(
            num_scalar_prefetch=0,
            grid=grid,
            in_specs=[
                pl.BlockSpec((bt, H + 2, W + 2, Cin), lambda b: (b, 0, 0, 0)),
                pl.BlockSpec((9 * Cin, G), lambda b: (0, 0)),
                pl.BlockSpec((1, 1), lambda b: (0, 0)),
            ],
            out_specs=pl.BlockSpec((bt * H * W, Cout), lambda b: (b, 0)),
        ),
        compiler_params=pltpu.CompilerParams(
            dimension_semantics=("parallel",),
            vmem_limit_bytes=32 * 1024 * 1024),
        cost_estimate=cost,
    )(xp, w_mat, a_arr)

    return jnp.transpose(out_flat.reshape(B, H, W, Cout), (0, 3, 1, 2))


def make_dense_ref(x_nchw, w_oihw, prelu_a):
    """Pure-JAX reference matching the PyTorch forward."""
    xf = x_nchw.astype(jnp.float32)
    conv = jax.lax.conv_general_dilated(
        xf, w_oihw.astype(jnp.float32),
        window_strides=(1, 1), padding=((1, 1), (1, 1)),
        dimension_numbers=("NCHW", "OIHW", "NCHW"))
    act = jnp.where(conv >= 0, conv, prelu_a * conv)   # PReLU, single slope
    return jnp.concatenate([xf, act], axis=1).astype(x_nchw.dtype)


if __name__ == "__main__":
    # make_dense(nChannels, nChannels_=4, growthRate=8): x has 4 channels,
    # conv adds 8 -> output 12 channels.
    B, Cin, H, W = 2, 4, 16, 16
    growth = 8

    key = jax.random.PRNGKey(0)
    kx, kw = jax.random.split(key, 2)
    x = jax.random.normal(kx, (B, Cin, H, W), dtype=jnp.float32)
    w = jax.random.normal(kw, (growth, Cin, 3, 3), dtype=jnp.float32) * 0.1
    a = jnp.float32(0.25)   # nn.PReLU() default init

    fwd = jax.jit(make_dense)
    out = jax.block_until_ready(fwd(x, w, a))
    ref = jax.block_until_ready(make_dense_ref(x, w, a))

    assert out.shape == (B, Cin + growth, H, W)
    assert jnp.allclose(out, ref, atol=1e-5, rtol=1e-5), "mismatch vs reference"
    print("KERNEL_OK")
</pallas_src>

<mosaic_0001>
module attributes {stable_mosaic.version = 11 : i64} {
  func.func @make_dense_kernel(%arg0: i32, %arg1: memref<1x18x18x4xf32, #tpu.memory_space<vmem>>, %arg2: memref<36x8xf32, #tpu.memory_space<vmem>>, %arg3: memref<1x1xf32, #tpu.memory_space<vmem>>, %arg4: memref<256x12xf32, #tpu.memory_space<vmem>>) attributes {dimension_semantics = [#tpu.dimension_semantics<parallel>], iteration_bounds = array<i64: 2>, scalar_prefetch = 0 : i64, scratch_operands = 0 : i64, tpu.core_type = #tpu.core_type<tc>, window_params = [{transform_indices = @transform_0, window_bounds = array<i64: 1, 18, 18, 4>}, {pipeline_mode = #tpu.pipeline_mode<synchronous>, transform_indices = @transform_1, window_bounds = array<i64: 36, 8>}, {pipeline_mode = #tpu.pipeline_mode<synchronous>, transform_indices = @transform_2, window_bounds = array<i64: 1, 1>}, {transform_indices = @transform_3, window_bounds = array<i64: 256, 12>}]} {
    %c0 = arith.constant 0 : index
    %c0_0 = arith.constant 0 : index
    %c0_1 = arith.constant 0 : index
    %c0_2 = arith.constant 0 : index
    %0 = vector.load %arg1[%c0, %c0_0, %c0_1, %c0_2] : memref<1x18x18x4xf32, #tpu.memory_space<vmem>>, vector<1x18x18x4xf32>
    %1 = vector.extract_strided_slice %0 {offsets = [0, 0, 0, 0], sizes = [1, 16, 16, 4], strides = [1, 1, 1, 1]} : vector<1x18x18x4xf32> to vector<1x16x16x4xf32>
    %2 = vector.shape_cast %1 : vector<1x16x16x4xf32> to vector<256x4xf32>
    %3 = vector.extract_strided_slice %0 {offsets = [0, 0, 1, 0], sizes = [1, 16, 16, 4], strides = [1, 1, 1, 1]} : vector<1x18x18x4xf32> to vector<1x16x16x4xf32>
    %4 = vector.shape_cast %3 : vector<1x16x16x4xf32> to vector<256x4xf32>
    %5 = vector.extract_strided_slice %0 {offsets = [0, 0, 2, 0], sizes = [1, 16, 16, 4], strides = [1, 1, 1, 1]} : vector<1x18x18x4xf32> to vector<1x16x16x4xf32>
    %6 = vector.shape_cast %5 : vector<1x16x16x4xf32> to vector<256x4xf32>
    %7 = vector.extract_strided_slice %0 {offsets = [0, 1, 0, 0], sizes = [1, 16, 16, 4], strides = [1, 1, 1, 1]} : vector<1x18x18x4xf32> to vector<1x16x16x4xf32>
    %8 = vector.shape_cast %7 : vector<1x16x16x4xf32> to vector<256x4xf32>
    %9 = vector.extract_strided_slice %0 {offsets = [0, 1, 1, 0], sizes = [1, 16, 16, 4], strides = [1, 1, 1, 1]} : vector<1x18x18x4xf32> to vector<1x16x16x4xf32>
    %10 = vector.shape_cast %9 : vector<1x16x16x4xf32> to vector<256x4xf32>
    %11 = vector.extract_strided_slice %0 {offsets = [0, 1, 2, 0], sizes = [1, 16, 16, 4], strides = [1, 1, 1, 1]} : vector<1x18x18x4xf32> to vector<1x16x16x4xf32>
    %12 = vector.shape_cast %11 : vector<1x16x16x4xf32> to vector<256x4xf32>
    %13 = vector.extract_strided_slice %0 {offsets = [0, 2, 0, 0], sizes = [1, 16, 16, 4], strides = [1, 1, 1, 1]} : vector<1x18x18x4xf32> to vector<1x16x16x4xf32>
    %14 = vector.shape_cast %13 : vector<1x16x16x4xf32> to vector<256x4xf32>
    %15 = vector.extract_strided_slice %0 {offsets = [0, 2, 1, 0], sizes = [1, 16, 16, 4], strides = [1, 1, 1, 1]} : vector<1x18x18x4xf32> to vector<1x16x16x4xf32>
    %16 = vector.shape_cast %15 : vector<1x16x16x4xf32> to vector<256x4xf32>
    %17 = vector.extract_strided_slice %0 {offsets = [0, 2, 2, 0], sizes = [1, 16, 16, 4], strides = [1, 1, 1, 1]} : vector<1x18x18x4xf32> to vector<1x16x16x4xf32>
    %18 = vector.shape_cast %17 : vector<1x16x16x4xf32> to vector<256x4xf32>
    %19 = tpu.concatenate %2, %4, %6, %8, %10, %12, %14, %16, %18 in 1 : vector<256x4xf32>, vector<256x4xf32>, vector<256x4xf32>, vector<256x4xf32>, vector<256x4xf32>, vector<256x4xf32>, vector<256x4xf32>, vector<256x4xf32>, vector<256x4xf32> -> vector<256x36xf32>
    %c0_3 = arith.constant 0 : index
    %c0_4 = arith.constant 0 : index
    %20 = vector.load %arg2[%c0_3, %c0_4] : memref<36x8xf32, #tpu.memory_space<vmem>>, vector<36x8xf32>
    %cst = arith.constant dense<0.000000e+00> : vector<256x8xf32>
    %21 = tpu.matmul %19, %20, %cst {dimension_numbers = #tpu.dot_dimension_numbers<[1], [0], [0], [1], [0, 0, 1, 1], [], []>} : vector<256x36xf32>, vector<36x8xf32>, vector<256x8xf32> -> vector<256x8xf32>
    %c0_5 = arith.constant 0 : index
    %c0_6 = arith.constant 0 : index
    %22 = vector.load %arg3[%c0_5, %c0_6] : memref<1x1xf32, #tpu.memory_space<vmem>>, vector<1x1xf32>
    %cst_7 = arith.constant 0.000000e+00 : f32
    %23 = vector.broadcast %cst_7 : f32 to vector<256x8xf32>
    %24 = arith.maximumf %21, %23 : vector<256x8xf32>
    %cst_8 = arith.constant 0.000000e+00 : f32
    %25 = vector.broadcast %cst_8 : f32 to vector<256x8xf32>
    %26 = arith.minimumf %21, %25 : vector<256x8xf32>
    %27 = vector.broadcast %22 : vector<1x1xf32> to vector<256x8xf32>
    %28 = arith.mulf %27, %26 : vector<256x8xf32>
    %29 = arith.addf %24, %28 : vector<256x8xf32>
    %30 = tpu.concatenate %10, %29 in 1 : vector<256x4xf32>, vector<256x8xf32> -> vector<256x12xf32>
    %c0_9 = arith.constant 0 : index
    %c0_10 = arith.constant 0 : index
    %31 = vector.load %arg4[%c0_9, %c0_10] : memref<256x12xf32, #tpu.memory_space<vmem>>, vector<256x12xf32>
    tpu.vector_store %arg4[%c0_9, %c0_10], %30 {strides = array<i32>} : memref<256x12xf32, #tpu.memory_space<vmem>>, vector<256x12xf32>,
    return
  }
  func.func @transform_0(%arg0: i32) -> (i32, i32, i32, i32) {
    %c0_i32 = arith.constant 0 : i32
    %c0_i32_0 = arith.constant 0 : i32
    %c0_i32_1 = arith.constant 0 : i32
    %c0_i32_2 = arith.constant 0 : i32
    return %arg0, %c0_i32, %c0_i32_0, %c0_i32_1 : i32, i32, i32, i32
  }
  func.func @transform_1(%arg0: i32) -> (i32, i32) {
    %c0_i32 = arith.constant 0 : i32
    %c0_i32_0 = arith.constant 0 : i32
    %c0_i32_1 = arith.constant 0 : i32
    return %c0_i32, %c0_i32_0 : i32, i32
  }
  func.func @transform_2(%arg0: i32) -> (i32, i32) {
    %c0_i32 = arith.constant 0 : i32
    %c0_i32_0 = arith.constant 0 : i32
    %c0_i32_1 = arith.constant 0 : i32
    return %c0_i32, %c0_i32_0 : i32, i32
  }
  func.func @transform_3(%arg0: i32) -> (i32, i32) {
    %c0_i32 = arith.constant 0 : i32
    %c0_i32_0 = arith.constant 0 : i32
    return %arg0, %c0_i32 : i32, i32
  }
}

</mosaic_0001>

<llo_original>
// kernel: make_dense.1
$region0: #{make_dense.1}
  #allocation0 [shape = 'u32[]', space=smem, size = 0x4, offset = 0x4, fixed_abs, tag = 'smem constant byte address 0x4 - core index']
  #allocation1 [shape = 'u32[72,128]{1,0:T(1,128)}', space=vmem, size = 0x9000, scoped, tag = 'internal scratch']
  #allocation2 [shape = 'f32[1,1]{1,0:T(1,128)S(1)}', space=vmem, size = 0x200, scoped, tag = 'scoped memory for make_dense.1']
  %s0 = inlined_call_operand.vmem [shape: f32[2,18,18,4], index: 0, kind: input, shape index: {}]
  %s1 = inlined_call_operand.vmem [shape: f32[36,8], index: 1, kind: input, shape index: {}]
  %s2 = inlined_call_operand.<no memory space> [shape: f32[1,1], index: 2, kind: input, shape index: {}]
  %s3 = inlined_call_operand.vmem [shape: f32[512,12], index: 3, kind: output, shape index: {}]
  %s4 = sld [smem:[#allocation0]]
  $region45: #{make_dense.1} parent=0
    _
  %s6 = ssub.s32 1, %s4
  %s7 = scalar_select 0, %s6, %s4
  %v8 = vstv %s2
  %9 = vst [vmem:[#allocation2] sm:$0x1] %v8
  loop: start=0, step=1, limit=4
  $region2: #{make_dense.1} parent=0 // loop_pre_header
    _
  $region3: #{make_dense.1} parent=0 // loop_header
    %s11 = sphi 0, %s15
    %p12 = scmp.ge.s32.totalorder %s11, 4
    %s21 = sphi 0, %s23
    %s24 = sphi 0, %s21
    %s25 = sphi 0, %s24
    %s41 = sphi 0, %s25
    %s45 = sphi 0, %s45
    %s47 = sphi 0, %s45
    %s48 = sphi 0, %s47
    %s62 = sphi 0, %s48
    %s66 = sphi 0, %s66
    %s68 = sphi 0, %s66
    %s69 = sphi 0, %s68
    %s83 = sphi 0, %s69
    %s89 = sphi 0, %s91
    %s92 = sphi 0, %s89
    %s93 = sphi 0, %s92
    %s109 = sphi 0, %s93
  $region4: #{make_dense.1} parent=0 // loop_header_branch
    %14 = sbr.rel (%p12) target = $region8
  $region5: #{make_dense.1} parent=0 // loop_body
    %s16 = ssub.s32 %s11, 1
    %s17 = ssub.s32 %s11, 2
    %s18 = sadd.s32 %s11, 1
    %s19 = ssub.s32 %s11, %s18
    %p20 = scmp.eq.s32.totalorder %s19, 0
    %s22 = sadd.s32 %s21, 1
    %s23 = scalar_select %p20, %s21, %s22
    %p26 = pneg %p20
    %p27 = scmp.eq.s32.totalorder %s11, 1
    %p28 = por %p26, %p27
    %p29 = scmp.ne.s32.totalorder %s21, %s24
    %p30 = scmp.eq.s32.totalorder %s11, 0
    %p31 = por %p29, %p30
    %p32 = scmp.ne.s32.totalorder %s21, %s24
    %p33 = scmp.eq.s32.totalorder %s16, 1
    %p34 = por %p32, %p33
    %p35 = scmp.ne.s32.totalorder %s24, %s25
    %p36 = scmp.eq.s32.totalorder %s16, 0
    %p37 = por %p35, %p36
    %p38 = scmp.ne.s32.totalorder %s24, %s25
    %p39 = scmp.eq.s32.totalorder %s17, 1
    %p40 = por %p38, %p39
    %p42 = scmp.ne.s32.totalorder %s25, %s41
    %p43 = scmp.eq.s32.totalorder %s17, 0
    %p44 = por %p42, %p43
    %s46 = sadd.s32 %s45, 1
    %p49 = scmp.eq.s32.totalorder %s11, 1
    %p50 = scmp.ne.s32.totalorder %s45, %s47
    %p51 = scmp.eq.s32.totalorder %s11, 0
    %p52 = por %p50, %p51
    %p53 = scmp.ne.s32.totalorder %s45, %s47
    %p54 = scmp.eq.s32.totalorder %s16, 1
    %p55 = por %p53, %p54
    %p56 = scmp.ne.s32.totalorder %s47, %s48
    %p57 = scmp.eq.s32.totalorder %s16, 0
    %p58 = por %p56, %p57
    %p59 = scmp.ne.s32.totalorder %s47, %s48
    %p60 = scmp.eq.s32.totalorder %s17, 1
    %p61 = por %p59, %p60
    %p63 = scmp.ne.s32.totalorder %s48, %s62
    %p64 = scmp.eq.s32.totalorder %s17, 0
    %p65 = por %p63, %p64
    %s67 = sadd.s32 %s66, 1
    %p70 = scmp.eq.s32.totalorder %s11, 1
    %p71 = scmp.ne.s32.totalorder %s66, %s68
    %p72 = scmp.eq.s32.totalorder %s11, 0
    %p73 = por %p71, %p72
    %p74 = scmp.ne.s32.totalorder %s66, %s68
    %p75 = scmp.eq.s32.totalorder %s16, 1
    %p76 = por %p74, %p75
    %p77 = scmp.ne.s32.totalorder %s68, %s69
    %p78 = scmp.eq.s32.totalorder %s16, 0
    %p79 = por %p77, %p78
    %p80 = scmp.ne.s32.totalorder %s68, %s69
    %p81 = scmp.eq.s32.totalorder %s17, 1
    %p82 = por %p80, %p81
    %p84 = scmp.ne.s32.totalorder %s69, %s83
    %p85 = scmp.eq.s32.totalorder %s17, 0
    %p86 = por %p84, %p85
    %s87 = ssub.s32 %s11, %s18
    %p88 = scmp.eq.s32.totalorder %s87, 0
    %s90 = sadd.s32 %s89, 1
    %s91 = scalar_select %p88, %s89, %s90
    %p94 = pneg %p88
    %p95 = scmp.eq.s32.totalorder %s11, 1
    %p96 = por %p94, %p95
    %p97 = scmp.ne.s32.totalorder %s89, %s92
    %p98 = scmp.eq.s32.totalorder %s11, 0
    %p99 = por %p97, %p98
    %p100 = scmp.ne.s32.totalorder %s89, %s92
    %p101 = scmp.eq.s32.totalorder %s16, 1
    %p102 = por %p100, %p101
    %p103 = scmp.ne.s32.totalorder %s92, %s93
    %p104 = scmp.eq.s32.totalorder %s16, 0
    %p105 = por %p103, %p104
    %p106 = scmp.ne.s32.totalorder %s92, %s93
    %p107 = scmp.eq.s32.totalorder %s17, 1
    %p108 = por %p106, %p107
    %p110 = scmp.ne.s32.totalorder %s93, %s109
    %p111 = scmp.eq.s32.totalorder %s17, 0
    %p112 = por %p110, %p111
    %p113 = scmp.le.s32.totalorder 1, %s11
    %p114 = scmp.lt.s32.totalorder %s11, 3
    %p115 = pnand %p113, %p114
    %p116 = pneg %p115
    // Predicated region
    $region9: #{make_dense.1} parent=5 // pred_check
      _
    $region10: #{make_dense.1} parent=5 // pred_check_branch
      %118 = sbr.rel (%p115) target = $region12
    $region11: #{make_dense.1} parent=5 // pred_region
      %s119 = ssub.s32 %s11, 1
      // Predicated region
      $region13: #{make_dense.1} parent=11 // pred_check
        %p120 = pneg %p58
      $region14: #{make_dense.1} parent=11 // pred_check_branch
        %122 = sbr.rel (%p120) target = $region16
      $region15: #{make_dense.1} parent=11 // pred_region
        _
      $region16: #{make_dense.1} parent=11 // pred_fallthru
        _
      // Predicated region
      $region17: #{make_dense.1} parent=11 // pred_check
        %p123 = pneg %p79
      $region18: #{make_dense.1} parent=11 // pred_check_branch
        %125 = sbr.rel (%p123) target = $region20
      $region19: #{make_dense.1} parent=11 // pred_region
        _
      $region20: #{make_dense.1} parent=11 // pred_fallthru
        _
    $region12: #{make_dense.1} parent=5 // pred_fallthru
      _
    %p126 = scmp.lt.s32.totalorder %s11, 2
    // Predicated region
    $region21: #{make_dense.1} parent=5 // pred_check
      %p127 = pneg %p126
    $region22: #{make_dense.1} parent=5 // pred_check_branch
      %129 = sbr.rel (%p127) target = $region24
    $region23: #{make_dense.1} parent=5 // pred_region
      // Predicated region
      $region25: #{make_dense.1} parent=23 // pred_check
        %p130 = pneg %p31
      $region26: #{make_dense.1} parent=23 // pred_check_branch
        %132 = sbr.rel (%p130) target = $region28
      $region27: #{make_dense.1} parent=23 // pred_region
        %p133 = scmp.lt.s32.totalorder %s11, 1
        %s134 = scalar_select %p133, %s11, 1
        %s135 = smul.addr %s134, 54
        %s136 = smul.addr %s135, 8
        %s137 = scalar_lea.vmem %s0, %s136
      $region28: #{make_dense.1} parent=23 // pred_fallthru
        _
    $region24: #{make_dense.1} parent=5 // pred_fallthru
      _
    %p138 = scmp.le.s32.totalorder 1, %s11
    %p139 = scmp.lt.s32.totalorder %s11, 3
    %p140 = pnand %p138, %p139
    %p141 = pneg %p140
    // Predicated region
    $region29: #{make_dense.1} parent=5 // pred_check
      _
    $region30: #{make_dense.1} parent=5 // pred_check_branch
      %143 = sbr.rel (%p140) target = $region32
    $region31: #{make_dense.1} parent=5 // pred_region
      %s144 = ssub.s32 %s11, 1
      %p145 = scmp.lt.s32.totalorder %s16, 1
      %s146 = scalar_select %p145, %s16, 1
      %s147 = smul.addr %s146, 54
      %s148 = smul.addr %s147, 8
      %s149 = scalar_lea.vmem %s0, %s148
      %p150 = pneg %p37
      %p151 = pneg %p34
      %p152 = pneg %p58
      %p153 = pneg %p55
      %p154 = pneg %p79
      %p155 = pneg %p76
      %p156 = pneg %p105
      %p157 = pneg %p102
      %s158 = smul.u32 32, %s16
      %p159 = scmp.lt.s32.totalorder %s158, 63
      %s160 = scalar_select %p159, %s158, 63
      %s161 = smul.addr %s160, 8
      %s162 = scalar_lea.vmem %s3, %s161
      %p163 = scmp.lt.s32.totalorder %s16, 1
      %s164 = scalar_select %p163, %s16, 1
      %s165 = smul.addr %s164, 54
      %s166 = smul.addr %s165, 8
      %s167 = scalar_lea.vmem %s0, %s166
      %s168 = smul.u32 32, %s16
      %p169 = scmp.lt.s32.totalorder %s168, 63
      %s170 = scalar_select %p169, %s168, 63
      %s171 = smul.addr %s170, 8
      %s172 = scalar_lea.vmem %s3, %s171
      %s173 = smul.u32 32, %s16
      %v174 = vld [vmem:[%s167] sm:$0xff]
      %v175 = vld [vmem:[%s167 + $0x8] sm:$0xff]
      %v176 = vld [vmem:[%s167 + $0x10] sm:$0x3]
      %v177 = vld [vmem:[%s167 + $0x18] sm:$0xff]
      %v178 = vld [vmem:[%s167 + $0x20] sm:$0xff]
      %v179 = vld [vmem:[%s167 + $0x28] sm:$0x3]
      %v180 = vld [vmem:[%s167 + $0x30] sm:$0xff]
      %v181 = vld [vmem:[%s167 + $0x38] sm:$0xff]
      %v182 = vld [vmem:[%s167 + $0x40] sm:$0x3]
      %v183 = vld [vmem:[%s167 + $0x48] sm:$0xff]
      %v184 = vld [vmem:[%s167 + $0x50] sm:$0xff]
      %v185 = vld [vmem:[%s167 + $0x58] sm:$0x3]
      %v186 = vld [vmem:[%s167 + $0x60] sm:$0xff]
      %v187 = vld [vmem:[%s167 + $0x68] sm:$0xff]
      %v188 = vld [vmem:[%s167 + $0x70] sm:$0x3]
      %v189 = vld [vmem:[%s167 + $0x78] sm:$0xff]
      %v190 = vld [vmem:[%s167 + $0x80] sm:$0xff]
      %v191 = vld [vmem:[%s167 + $0x88] sm:$0x3]
      %v192 = vld [vmem:[%s167 + $0x90] sm:$0xff]
      %v193 = vld [vmem:[%s167 + $0x98] sm:$0xff]
      %v194 = vld [vmem:[%s167 + $0xa0] sm:$0x3]
      %v195 = vld [vmem:[%s167 + $0xa8] sm:$0xff]
      %v196 = vld [vmem:[%s167 + $0xb0] sm:$0xff]
      %v197 = vld [vmem:[%s167 + $0xb8] sm:$0x3]
      %v198 = vld [vmem:[%s167 + $0xc0] sm:$0xff]
      %v199 = vld [vmem:[%s167 + $0xc8] sm:$0xff]
      %v200 = vld [vmem:[%s167 + $0xd0] sm:$0x3]
      %v201 = vld [vmem:[%s167 + $0xd8] sm:$0xff]
      %v202 = vld [vmem:[%s167 + $0xe0] sm:$0xff]
      %v203 = vld [vmem:[%s167 + $0xe8] sm:$0x3]
      %v204 = vld [vmem:[%s167 + $0xf0] sm:$0xff]
      %v205 = vld [vmem:[%s167 + $0xf8] sm:$0xff]
      %v206 = vld [vmem:[%s167 + $0x100] sm:$0x3]
      %v207 = vld [vmem:[%s167 + $0x108] sm:$0xff]
      %v208 = vld [vmem:[%s167 + $0x110] sm:$0xff]
      %v209 = vld [vmem:[%s167 + $0x118] sm:$0x3]
      %v210 = vld [vmem:[%s167 + $0x120] sm:$0xff]
      %v211 = vld [vmem:[%s167 + $0x128] sm:$0xff]
      %v212 = vld [vmem:[%s167 + $0x130] sm:$0x3]
      %v213 = vld [vmem:[%s167 + $0x138] sm:$0xff]
      %v214 = vld [vmem:[%s167 + $0x140] sm:$0xff]
      %v215 = vld [vmem:[%s167 + $0x148] sm:$0x3]
      %v216 = vld [vmem:[%s167 + $0x150] sm:$0xff]
      %v217 = vld [vmem:[%s167 + $0x158] sm:$0xff]
      %v218 = vld [vmem:[%s167 + $0x160] sm:$0x3]
      %v219 = vld [vmem:[%s167 + $0x168] sm:$0xff]
      %v220 = vld [vmem:[%s167 + $0x170] sm:$0xff]
      %v221 = vld [vmem:[%s167 + $0x178] sm:$0x3]
      %v222 = vld [vmem:[%s167 + $0x180] sm:$0xff]
      %v223 = vld [vmem:[%s167 + $0x188] sm:$0xff]
      %v224 = vld [vmem:[%s167 + $0x190] sm:$0x3]
      %v225 = vld [vmem:[%s167 + $0x198] sm:$0xff]
      %v226 = vld [vmem:[%s167 + $0x1a0] sm:$0xff]
      %v227 = vld [vmem:[%s167 + $0x1a8] sm:$0x3]
      %vm276 = vcmask 1046528
      %v277 = vrot.slane %v174, 1
      %v278 = vrot.slane %v175, 1
      %v279 = vsel %vm276, %v277, %v278
      %v280 = vrot.slane %v176, 1
      %v281 = vsel %vm276, %v278, %v280
      %v282 = vrot.slane %v177, 1
      %v283 = vrot.slane %v178, 1
      %v284 = vsel %vm276, %v282, %v283
      %v285 = vrot.slane %v179, 1
      %v286 = vsel %vm276, %v283, %v285
      %v287 = vrot.slane %v180, 1
      %v288 = vrot.slane %v181, 1
      %v289 = vsel %vm276, %v287, %v288
      %v290 = vrot.slane %v182, 1
      %v291 = vsel %vm276, %v288, %v290
      %v292 = vrot.slane %v183, 1
      %v293 = vrot.slane %v184, 1
      %v294 = vsel %vm276, %v292, %v293
      %v295 = vrot.slane %v185, 1
      %v296 = vsel %vm276, %v293, %v295
      %v297 = vrot.slane %v186, 1
      %v298 = vrot.slane %v187, 1
      %v299 = vsel %vm276, %v297, %v298
      %v300 = vrot.slane %v188, 1
      %v301 = vsel %vm276, %v298, %v300
      %v302 = vrot.slane %v189, 1
      %v303 = vrot.slane %v190, 1
      %v304 = vsel %vm276, %v302, %v303
      %v305 = vrot.slane %v191, 1
      %v306 = vsel %vm276, %v303, %v305
      %v307 = vrot.slane %v192, 1
      %v308 = vrot.slane %v193, 1
      %v309 = vsel %vm276, %v307, %v308
      %v310 = vrot.slane %v194, 1
      %v311 = vsel %vm276, %v308, %v310
      %v312 = vrot.slane %v195, 1
      %v313 = vrot.slane %v196, 1
      %v314 = vsel %vm276, %v312, %v313
      %v315 = vrot.slane %v197, 1
      %v316 = vsel %vm276, %v313, %v315
      %v317 = vrot.slane %v198, 1
      %v318 = vrot.slane %v199, 1
      %v319 = vsel %vm276, %v317, %v318
      %v320 = vrot.slane %v200, 1
      %v321 = vsel %vm276, %v318, %v320
      %v322 = vrot.slane %v201, 1
      %v323 = vrot.slane %v202, 1
      %v324 = vsel %vm276, %v322, %v323
      %v325 = vrot.slane %v203, 1
      %v326 = vsel %vm276, %v323, %v325
      %v327 = vrot.slane %v204, 1
      %v328 = vrot.slane %v205, 1
      %v329 = vsel %vm276, %v327, %v328
      %v330 = vrot.slane %v206, 1
      %v331 = vsel %vm276, %v328, %v330
      %v332 = vrot.slane %v207, 1
      %v333 = vrot.slane %v208, 1
      %v334 = vsel %vm276, %v332, %v333
      %v335 = vrot.slane %v209, 1
      %v336 = vsel %vm276, %v333, %v335
      %v337 = vrot.slane %v210, 1
      %v338 = vrot.slane %v211, 1
      %v339 = vsel %vm276, %v337, %v338
      %v340 = vrot.slane %v212, 1
      %v341 = vsel %vm276, %v338, %v340
      %v342 = vrot.slane %v213, 1
      %v343 = vrot.slane %v214, 1
      %v344 = vsel %vm276, %v342, %v343
      %v345 = vrot.slane %v215, 1
      %v346 = vsel %vm276, %v343, %v345
      %v347 = vrot.slane %v216, 1
      %v348 = vrot.slane %v217, 1
      %v349 = vsel %vm276, %v347, %v348
      %v350 = vrot.slane %v218, 1
      %v351 = vsel %vm276, %v348, %v350
      %v352 = vrot.slane %v219, 1
      %v353 = vrot.slane %v220, 1
      %v354 = vsel %vm276, %v352, %v353
      %v355 = vrot.slane %v221, 1
      %v356 = vsel %vm276, %v353, %v355
      %vm357 = vcmask 1045504
      %v358 = vrot.slane %v174, 2
      %v359 = vrot.slane %v175, 2
      %v360 = vsel %vm357, %v358, %v359
      %v361 = vrot.slane %v176, 2
      %v362 = vsel %vm357, %v359, %v361
      %v363 = vrot.slane %v177, 2
      %v364 = vrot.slane %v178, 2
      %v365 = vsel %vm357, %v363, %v364
      %v366 = vrot.slane %v179, 2
      %v367 = vsel %vm357, %v364, %v366
      %v368 = vrot.slane %v180, 2
      %v369 = vrot.slane %v181, 2
      %v370 = vsel %vm357, %v368, %v369
      %v371 = vrot.slane %v182, 2
      %v372 = vsel %vm357, %v369, %v371
      %v373 = vrot.slane %v183, 2
      %v374 = vrot.slane %v184, 2
      %v375 = vsel %vm357, %v373, %v374
      %v376 = vrot.slane %v185, 2
      %v377 = vsel %vm357, %v374, %v376
      %v378 = vrot.slane %v186, 2
      %v379 = vrot.slane %v187, 2
      %v380 = vsel %vm357, %v378, %v379
      %v381 = vrot.slane %v188, 2
      %v382 = vsel %vm357, %v379, %v381
      %v383 = vrot.slane %v189, 2
      %v384 = vrot.slane %v190, 2
      %v385 = vsel %vm357, %v383, %v384
      %v386 = vrot.slane %v191, 2
      %v387 = vsel %vm357, %v384, %v386
      %v388 = vrot.slane %v192, 2
      %v389 = vrot.slane %v193, 2
      %v390 = vsel %vm357, %v388, %v389
      %v391 = vrot.slane %v194, 2
      %v392 = vsel %vm357, %v389, %v391
      %v393 = vrot.slane %v195, 2
      %v394 = vrot.slane %v196, 2
      %v395 = vsel %vm357, %v393, %v394
      %v396 = vrot.slane %v197, 2
      %v397 = vsel %vm357, %v394, %v396
      %v398 = vrot.slane %v198, 2
      %v399 = vrot.slane %v199, 2
      %v400 = vsel %vm357, %v398, %v399
      %v401 = vrot.slane %v200, 2
      %v402 = vsel %vm357, %v399, %v401
      %v403 = vrot.slane %v201, 2
      %v404 = vrot.slane %v202, 2
      %v405 = vsel %vm357, %v403, %v404
      %v406 = vrot.slane %v203, 2
      %v407 = vsel %vm357, %v404, %v406
      %v408 = vrot.slane %v204, 2
      %v409 = vrot.slane %v205, 2
      %v410 = vsel %vm357, %v408, %v409
      %v411 = vrot.slane %v206, 2
      %v412 = vsel %vm357, %v409, %v411
      %v413 = vrot.slane %v207, 2
      %v414 = vrot.slane %v208, 2
      %v415 = vsel %vm357, %v413, %v414
      %v416 = vrot.slane %v209, 2
      %v417 = vsel %vm357, %v414, %v416
      %v418 = vrot.slane %v210, 2
      %v419 = vrot.slane %v211, 2
      %v420 = vsel %vm357, %v418, %v419
      %v421 = vrot.slane %v212, 2
      %v422 = vsel %vm357, %v419, %v421
      %v423 = vrot.slane %v213, 2
      %v424 = vrot.slane %v214, 2
      %v425 = vsel %vm357, %v423, %v424
      %v426 = vrot.slane %v215, 2
      %v427 = vsel %vm357, %v424, %v426
      %v428 = vrot.slane %v216, 2
      %v429 = vrot.slane %v217, 2
      %v430 = vsel %vm357, %v428, %v429
      %v431 = vrot.slane %v218, 2
      %v432 = vsel %vm357, %v429, %v431
      %v433 = vrot.slane %v219, 2
      %v434 = vrot.slane %v220, 2
      %v435 = vsel %vm357, %v433, %v434
      %v436 = vrot.slane %v221, 2
      %v437 = vsel %vm357, %v434, %v436
      %v441 = vrot.slane %v222, 1
      %v442 = vrot.slane %v223, 1
      %v443 = vsel %vm276, %v441, %v442
      %v444 = vrot.slane %v224, 1
      %v445 = vsel %vm276, %v442, %v444
      %v478 = vrot.slane %v222, 2
      %v479 = vrot.slane %v223, 2
      %v480 = vsel %vm357, %v478, %v479
      %v481 = vrot.slane %v224, 2
      %v482 = vsel %vm357, %v479, %v481
      %v486 = vrot.slane %v225, 1
      %v487 = vrot.slane %v226, 1
      %v488 = vsel %vm276, %v486, %v487
      %v489 = vrot.slane %v227, 1
      %v490 = vsel %vm276, %v487, %v489
      %v491 = vrot.slane %v225, 2
      %v492 = vrot.slane %v226, 2
      %v493 = vsel %vm357, %v491, %v492
      %v494 = vrot.slane %v227, 2
      %v495 = vsel %vm357, %v492, %v494
      %496 = vrot.lane.b32.xlu0 %v279, 4
      %v497 = vpop.permute.xlu0 %496
      %498 = vrot.lane.b32.xlu0 %v281, 4
      %v499 = vpop.permute.xlu0 %498
      %500 = vrot.lane.b32.xlu0 %v284, 4
      %v501 = vpop.permute.xlu0 %500
      %502 = vrot.lane.b32.xlu0 %v286, 4
      %v503 = vpop.permute.xlu0 %502
      %504 = vrot.lane.b32.xlu0 %v289, 4
      %v505 = vpop.permute.xlu0 %504
      %506 = vrot.lane.b32.xlu0 %v291, 4
      %v507 = vpop.permute.xlu0 %506
      %508 = vrot.lane.b32.xlu0 %v294, 4
      %v509 = vpop.permute.xlu0 %508
      %510 = vrot.lane.b32.xlu0 %v296, 4
      %v511 = vpop.permute.xlu0 %510
      %512 = vrot.lane.b32.xlu0 %v299, 4
      %v513 = vpop.permute.xlu0 %512
      %514 = vrot.lane.b32.xlu0 %v301, 4
      %v515 = vpop.permute.xlu0 %514
      %516 = vrot.lane.b32.xlu0 %v304, 4
      %v517 = vpop.permute.xlu0 %516
      %518 = vrot.lane.b32.xlu0 %v306, 4
      %v519 = vpop.permute.xlu0 %518
      %520 = vrot.lane.b32.xlu0 %v309, 4
      %v521 = vpop.permute.xlu0 %520
      %522 = vrot.lane.b32.xlu0 %v311, 4
      %v523 = vpop.permute.xlu0 %522
      %524 = vrot.lane.b32.xlu0 %v314, 4
      %v525 = vpop.permute.xlu0 %524
      %526 = vrot.lane.b32.xlu0 %v316, 4
      %v527 = vpop.permute.xlu0 %526
      %528 = vrot.lane.b32.xlu0 %v319, 4
      %v529 = vpop.permute.xlu0 %528
      %530 = vrot.lane.b32.xlu0 %v321, 4
      %v531 = vpop.permute.xlu0 %530
      %532 = vrot.lane.b32.xlu0 %v324, 4
      %v533 = vpop.permute.xlu0 %532
      %534 = vrot.lane.b32.xlu0 %v326, 4
      %v535 = vpop.permute.xlu0 %534
      %536 = vrot.lane.b32.xlu0 %v329, 4
      %v537 = vpop.permute.xlu0 %536
      %538 = vrot.lane.b32.xlu0 %v331, 4
      %v539 = vpop.permute.xlu0 %538
      %540 = vrot.lane.b32.xlu0 %v334, 4
      %v541 = vpop.permute.xlu0 %540
      %542 = vrot.lane.b32.xlu0 %v336, 4
      %v543 = vpop.permute.xlu0 %542
      %544 = vrot.lane.b32.xlu0 %v339, 4
      %v545 = vpop.permute.xlu0 %544
      %546 = vrot.lane.b32.xlu0 %v341, 4
      %v547 = vpop.permute.xlu0 %546
      %548 = vrot.lane.b32.xlu0 %v344, 4
      %v549 = vpop.permute.xlu0 %548
      %550 = vrot.lane.b32.xlu0 %v346, 4
      %v551 = vpop.permute.xlu0 %550
      %552 = vrot.lane.b32.xlu0 %v349, 4
      %v553 = vpop.permute.xlu0 %552
      %554 = vrot.lane.b32.xlu0 %v351, 4
      %v555 = vpop.permute.xlu0 %554
      %556 = vrot.lane.b32.xlu0 %v354, 4
      %v557 = vpop.permute.xlu0 %556
      %558 = vrot.lane.b32.xlu0 %v356, 4
      %v559 = vpop.permute.xlu0 %558
      %592 = vrot.lane.b32.xlu0 %v360, 8
      %v593 = vpop.permute.xlu0 %592
      %594 = vrot.lane.b32.xlu0 %v362, 8
      %v595 = vpop.permute.xlu0 %594
      %596 = vrot.lane.b32.xlu0 %v365, 8
      %v597 = vpop.permute.xlu0 %596
      %598 = vrot.lane.b32.xlu0 %v367, 8
      %v599 = vpop.permute.xlu0 %598
      %600 = vrot.lane.b32.xlu0 %v370, 8
      %v601 = vpop.permute.xlu0 %600
      %602 = vrot.lane.b32.xlu0 %v372, 8
      %v603 = vpop.permute.xlu0 %602
      %604 = vrot.lane.b32.xlu0 %v375, 8
      %v605 = vpop.permute.xlu0 %604
      %606 = vrot.lane.b32.xlu0 %v377, 8
      %v607 = vpop.permute.xlu0 %606
      %608 = vrot.lane.b32.xlu0 %v380, 8
      %v609 = vpop.permute.xlu0 %608
      %610 = vrot.lane.b32.xlu0 %v382, 8
      %v611 = vpop.permute.xlu0 %610
      %612 = vrot.lane.b32.xlu0 %v385, 8
      %v613 = vpop.permute.xlu0 %612
      %614 = vrot.lane.b32.xlu0 %v387, 8
      %v615 = vpop.permute.xlu0 %614
      %616 = vrot.lane.b32.xlu0 %v390, 8
      %v617 = vpop.permute.xlu0 %616
      %618 = vrot.lane.b32.xlu0 %v392, 8
      %v619 = vpop.permute.xlu0 %618
      %620 = vrot.lane.b32.xlu0 %v395, 8
      %v621 = vpop.permute.xlu0 %620
      %622 = vrot.lane.b32.xlu0 %v397, 8
      %v623 = vpop.permute.xlu0 %622
      %624 = vrot.lane.b32.xlu0 %v400, 8
      %v625 = vpop.permute.xlu0 %624
      %626 = vrot.lane.b32.xlu0 %v402, 8
      %v627 = vpop.permute.xlu0 %626
      %628 = vrot.lane.b32.xlu0 %v405, 8
      %v629 = vpop.permute.xlu0 %628
      %630 = vrot.lane.b32.xlu0 %v407, 8
      %v631 = vpop.permute.xlu0 %630
      %632 = vrot.lane.b32.xlu0 %v410, 8
      %v633 = vpop.permute.xlu0 %632
      %634 = vrot.lane.b32.xlu0 %v412, 8
      %v635 = vpop.permute.xlu0 %634
      %636 = vrot.lane.b32.xlu0 %v415, 8
      %v637 = vpop.permute.xlu0 %636
      %638 = vrot.lane.b32.xlu0 %v417, 8
      %v639 = vpop.permute.xlu0 %638
      %640 = vrot.lane.b32.xlu0 %v420, 8
      %v641 = vpop.permute.xlu0 %640
      %642 = vrot.lane.b32.xlu0 %v422, 8
      %v643 = vpop.permute.xlu0 %642
      %644 = vrot.lane.b32.xlu0 %v425, 8
      %v645 = vpop.permute.xlu0 %644
      %646 = vrot.lane.b32.xlu0 %v427, 8
      %v647 = vpop.permute.xlu0 %646
      %648 = vrot.lane.b32.xlu0 %v430, 8
      %v649 = vpop.permute.xlu0 %648
      %650 = vrot.lane.b32.xlu0 %v432, 8
      %v651 = vpop.permute.xlu0 %650
      %652 = vrot.lane.b32.xlu0 %v435, 8
      %v653 = vpop.permute.xlu0 %652
      %654 = vrot.lane.b32.xlu0 %v437, 8
      %v655 = vpop.permute.xlu0 %654
      %688 = vrot.lane.b32.xlu0 %v177, 12
      %v689 = vpop.permute.xlu0 %688
      %690 = vrot.lane.b32.xlu0 %v178, 12
      %v691 = vpop.permute.xlu0 %690
      %692 = vrot.lane.b32.xlu0 %v180, 12
      %v693 = vpop.permute.xlu0 %692
      %694 = vrot.lane.b32.xlu0 %v181, 12
      %v695 = vpop.permute.xlu0 %694
      %696 = vrot.lane.b32.xlu0 %v183, 12
      %v697 = vpop.permute.xlu0 %696
      %698 = vrot.lane.b32.xlu0 %v184, 12
      %v699 = vpop.permute.xlu0 %698
      %700 = vrot.lane.b32.xlu0 %v186, 12
      %v701 = vpop.permute.xlu0 %700
      %702 = vrot.lane.b32.xlu0 %v187, 12
      %v703 = vpop.permute.xlu0 %702
      %704 = vrot.lane.b32.xlu0 %v189, 12
      %v705 = vpop.permute.xlu0 %704
      %706 = vrot.lane.b32.xlu0 %v190, 12
      %v707 = vpop.permute.xlu0 %706
      %708 = vrot.lane.b32.xlu0 %v192, 12
      %v709 = vpop.permute.xlu0 %708
      %710 = vrot.lane.b32.xlu0 %v193, 12
      %v711 = vpop.permute.xlu0 %710
      %712 = vrot.lane.b32.xlu0 %v195, 12
      %v713 = vpop.permute.xlu0 %712
      %714 = vrot.lane.b32.xlu0 %v196, 12
      %v715 = vpop.permute.xlu0 %714
      %716 = vrot.lane.b32.xlu0 %v198, 12
      %v717 = vpop.permute.xlu0 %716
      %718 = vrot.lane.b32.xlu0 %v199, 12
      %v719 = vpop.permute.xlu0 %718
      %720 = vrot.lane.b32.xlu0 %v201, 12
      %v721 = vpop.permute.xlu0 %720
      %722 = vrot.lane.b32.xlu0 %v202, 12
      %v723 = vpop.permute.xlu0 %722
      %724 = vrot.lane.b32.xlu0 %v204, 12
      %v725 = vpop.permute.xlu0 %724
      %726 = vrot.lane.b32.xlu0 %v205, 12
      %v727 = vpop.permute.xlu0 %726
      %728 = vrot.lane.b32.xlu0 %v207, 12
      %v729 = vpop.permute.xlu0 %728
      %730 = vrot.lane.b32.xlu0 %v208, 12
      %v731 = vpop.permute.xlu0 %730
      %732 = vrot.lane.b32.xlu0 %v210, 12
      %v733 = vpop.permute.xlu0 %732
      %734 = vrot.lane.b32.xlu0 %v211, 12
      %v735 = vpop.permute.xlu0 %734
      %736 = vrot.lane.b32.xlu0 %v213, 12
      %v737 = vpop.permute.xlu0 %736
      %738 = vrot.lane.b32.xlu0 %v214, 12
      %v739 = vpop.permute.xlu0 %738
      %740 = vrot.lane.b32.xlu0 %v216, 12
      %v741 = vpop.permute.xlu0 %740
      %742 = vrot.lane.b32.xlu0 %v217, 12
      %v743 = vpop.permute.xlu0 %742
      %744 = vrot.lane.b32.xlu0 %v219, 12
      %v745 = vpop.permute.xlu0 %744
      %746 = vrot.lane.b32.xlu0 %v220, 12
      %v747 = vpop.permute.xlu0 %746
      %748 = vrot.lane.b32.xlu0 %v222, 12
      %v749 = vpop.permute.xlu0 %748
      %750 = vrot.lane.b32.xlu0 %v223, 12
      %v751 = vpop.permute.xlu0 %750
      %784 = vrot.lane.b32.xlu0 %v284, 16
      %v785 = vpop.permute.xlu0 %784
      %786 = vrot.lane.b32.xlu0 %v286, 16
      %v787 = vpop.permute.xlu0 %786
      %788 = vrot.lane.b32.xlu0 %v289, 16
      %v789 = vpop.permute.xlu0 %788
      %790 = vrot.lane.b32.xlu0 %v291, 16
      %v791 = vpop.permute.xlu0 %790
      %792 = vrot.lane.b32.xlu0 %v294, 16
      %v793 = vpop.permute.xlu0 %792
      %794 = vrot.lane.b32.xlu0 %v296, 16
      %v795 = vpop.permute.xlu0 %794
      %796 = vrot.lane.b32.xlu0 %v299, 16
      %v797 = vpop.permute.xlu0 %796
      %798 = vrot.lane.b32.xlu0 %v301, 16
      %v799 = vpop.permute.xlu0 %798
      %800 = vrot.lane.b32.xlu0 %v304, 16
      %v801 = vpop.permute.xlu0 %800
      %802 = vrot.lane.b32.xlu0 %v306, 16
      %v803 = vpop.permute.xlu0 %802
      %804 = vrot.lane.b32.xlu0 %v309, 16
      %v805 = vpop.permute.xlu0 %804
      %806 = vrot.lane.b32.xlu0 %v311, 16
      %v807 = vpop.permute.xlu0 %806
      %808 = vrot.lane.b32.xlu0 %v314, 16
      %v809 = vpop.permute.xlu0 %808
      %810 = vrot.lane.b32.xlu0 %v316, 16
      %v811 = vpop.permute.xlu0 %810
      %812 = vrot.lane.b32.xlu0 %v319, 16
      %v813 = vpop.permute.xlu0 %812
      %814 = vrot.lane.b32.xlu0 %v321, 16
      %v815 = vpop.permute.xlu0 %814
      %816 = vrot.lane.b32.xlu0 %v324, 16
      %v817 = vpop.permute.xlu0 %816
      %818 = vrot.lane.b32.xlu0 %v326, 16
      %v819 = vpop.permute.xlu0 %818
      %820 = vrot.lane.b32.xlu0 %v329, 16
      %v821 = vpop.permute.xlu0 %820
      %822 = vrot.lane.b32.xlu0 %v331, 16
      %v823 = vpop.permute.xlu0 %822
      %824 = vrot.lane.b32.xlu0 %v334, 16
      %v825 = vpop.permute.xlu0 %824
      %826 = vrot.lane.b32.xlu0 %v336, 16
      %v827 = vpop.permute.xlu0 %826
      %828 = vrot.lane.b32.xlu0 %v339, 16
      %v829 = vpop.permute.xlu0 %828
      %830 = vrot.lane.b32.xlu0 %v341, 16
      %v831 = vpop.permute.xlu0 %830
      %832 = vrot.lane.b32.xlu0 %v344, 16
      %v833 = vpop.permute.xlu0 %832
      %834 = vrot.lane.b32.xlu0 %v346, 16
      %v835 = vpop.permute.xlu0 %834
      %836 = vrot.lane.b32.xlu0 %v349, 16
      %v837 = vpop.permute.xlu0 %836
      %838 = vrot.lane.b32.xlu0 %v351, 16
      %v839 = vpop.permute.xlu0 %838
      %840 = vrot.lane.b32.xlu0 %v354, 16
      %v841 = vpop.permute.xlu0 %840
      %842 = vrot.lane.b32.xlu0 %v356, 16
      %v843 = vpop.permute.xlu0 %842
      %844 = vrot.lane.b32.xlu0 %v443, 16
      %v845 = vpop.permute.xlu0 %844
      %846 = vrot.lane.b32.xlu0 %v445, 16
      %v847 = vpop.permute.xlu0 %846
      %880 = vrot.lane.b32.xlu0 %v365, 20
      %v881 = vpop.permute.xlu0 %880
      %882 = vrot.lane.b32.xlu0 %v367, 20
      %v883 = vpop.permute.xlu0 %882
      %884 = vrot.lane.b32.xlu0 %v370, 20
      %v885 = vpop.permute.xlu0 %884
      %886 = vrot.lane.b32.xlu0 %v372, 20
      %v887 = vpop.permute.xlu0 %886
      %888 = vrot.lane.b32.xlu0 %v375, 20
      %v889 = vpop.permute.xlu0 %888
      %890 = vrot.lane.b32.xlu0 %v377, 20
      %v891 = vpop.permute.xlu0 %890
      %892 = vrot.lane.b32.xlu0 %v380, 20
      %v893 = vpop.permute.xlu0 %892
      %894 = vrot.lane.b32.xlu0 %v382, 20
      %v895 = vpop.permute.xlu0 %894
      %896 = vrot.lane.b32.xlu0 %v385, 20
      %v897 = vpop.permute.xlu0 %896
      %898 = vrot.lane.b32.xlu0 %v387, 20
      %v899 = vpop.permute.xlu0 %898
      %900 = vrot.lane.b32.xlu0 %v390, 20
      %v901 = vpop.permute.xlu0 %900
      %902 = vrot.lane.b32.xlu0 %v392, 20
      %v903 = vpop.permute.xlu0 %902
      %904 = vrot.lane.b32.xlu0 %v395, 20
      %v905 = vpop.permute.xlu0 %904
      %906 = vrot.lane.b32.xlu0 %v397, 20
      %v907 = vpop.permute.xlu0 %906
      %908 = vrot.lane.b32.xlu0 %v400, 20
      %v909 = vpop.permute.xlu0 %908
      %910 = vrot.lane.b32.xlu0 %v402, 20
      %v911 = vpop.permute.xlu0 %910
      %912 = vrot.lane.b32.xlu0 %v405, 20
      %v913 = vpop.permute.xlu0 %912
      %914 = vrot.lane.b32.xlu0 %v407, 20
      %v915 = vpop.permute.xlu0 %914
      %916 = vrot.lane.b32.xlu0 %v410, 20
      %v917 = vpop.permute.xlu0 %916
      %918 = vrot.lane.b32.xlu0 %v412, 20
      %v919 = vpop.permute.xlu0 %918
      %920 = vrot.lane.b32.xlu0 %v415, 20
      %v921 = vpop.permute.xlu0 %920
      %922 = vrot.lane.b32.xlu0 %v417, 20
      %v923 = vpop.permute.xlu0 %922
      %924 = vrot.lane.b32.xlu0 %v420, 20
      %v925 = vpop.permute.xlu0 %924
      %926 = vrot.lane.b32.xlu0 %v422, 20
      %v927 = vpop.permute.xlu0 %926
      %928 = vrot.lane.b32.xlu0 %v425, 20
      %v929 = vpop.permute.xlu0 %928
      %930 = vrot.lane.b32.xlu0 %v427, 20
      %v931 = vpop.permute.xlu0 %930
      %932 = vrot.lane.b32.xlu0 %v430, 20
      %v933 = vpop.permute.xlu0 %932
      %934 = vrot.lane.b32.xlu0 %v432, 20
      %v935 = vpop.permute.xlu0 %934
      %936 = vrot.lane.b32.xlu0 %v435, 20
      %v937 = vpop.permute.xlu0 %936
      %938 = vrot.lane.b32.xlu0 %v437, 20
      %v939 = vpop.permute.xlu0 %938
      %940 = vrot.lane.b32.xlu0 %v480, 20
      %v941 = vpop.permute.xlu0 %940
      %942 = vrot.lane.b32.xlu0 %v482, 20
      %v943 = vpop.permute.xlu0 %942
      %976 = vrot.lane.b32.xlu0 %v180, 24
      %v977 = vpop.permute.xlu0 %976
      %978 = vrot.lane.b32.xlu0 %v181, 24
      %v979 = vpop.permute.xlu0 %978
      %980 = vrot.lane.b32.xlu0 %v183, 24
      %v981 = vpop.permute.xlu0 %980
      %982 = vrot.lane.b32.xlu0 %v184, 24
      %v983 = vpop.permute.xlu0 %982
      %984 = vrot.lane.b32.xlu0 %v186, 24
      %v985 = vpop.permute.xlu0 %984
      %986 = vrot.lane.b32.xlu0 %v187, 24
      %v987 = vpop.permute.xlu0 %986
      %988 = vrot.lane.b32.xlu0 %v189, 24
      %v989 = vpop.permute.xlu0 %988
      %990 = vrot.lane.b32.xlu0 %v190, 24
      %v991 = vpop.permute.xlu0 %990
      %992 = vrot.lane.b32.xlu0 %v192, 24
      %v993 = vpop.permute.xlu0 %992
      %994 = vrot.lane.b32.xlu0 %v193, 24
      %v995 = vpop.permute.xlu0 %994
      %996 = vrot.lane.b32.xlu0 %v195, 24
      %v997 = vpop.permute.xlu0 %996
      %998 = vrot.lane.b32.xlu0 %v196, 24
      %v999 = vpop.permute.xlu0 %998
      %1000 = vrot.lane.b32.xlu0 %v198, 24
      %v1001 = vpop.permute.xlu0 %1000
      %1002 = vrot.lane.b32.xlu0 %v199, 24
      %v1003 = vpop.permute.xlu0 %1002
      %1004 = vrot.lane.b32.xlu0 %v201, 24
      %v1005 = vpop.permute.xlu0 %1004
      %1006 = vrot.lane.b32.xlu0 %v202, 24
      %v1007 = vpop.permute.xlu0 %1006
      %1008 = vrot.lane.b32.xlu0 %v204, 24
      %v1009 = vpop.permute.xlu0 %1008
      %1010 = vrot.lane.b32.xlu0 %v205, 24
      %v1011 = vpop.permute.xlu0 %1010
      %1012 = vrot.lane.b32.xlu0 %v207, 24
      %v1013 = vpop.permute.xlu0 %1012
      %1014 = vrot.lane.b32.xlu0 %v208, 24
      %v1015 = vpop.permute.xlu0 %1014
      %1016 = vrot.lane.b32.xlu0 %v210, 24
      %v1017 = vpop.permute.xlu0 %1016
      %1018 = vrot.lane.b32.xlu0 %v211, 24
      %v1019 = vpop.permute.xlu0 %1018
      %1020 = vrot.lane.b32.xlu0 %v213, 24
      %v1021 = vpop.permute.xlu0 %1020
      %1022 = vrot.lane.b32.xlu0 %v214, 24
      %v1023 = vpop.permute.xlu0 %1022
      %1024 = vrot.lane.b32.xlu0 %v216, 24
      %v1025 = vpop.permute.xlu0 %1024
      %1026 = vrot.lane.b32.xlu0 %v217, 24
      %v1027 = vpop.permute.xlu0 %1026
      %1028 = vrot.lane.b32.xlu0 %v219, 24
      %v1029 = vpop.permute.xlu0 %1028
      %1030 = vrot.lane.b32.xlu0 %v220, 24
      %v1031 = vpop.permute.xlu0 %1030
      %1032 = vrot.lane.b32.xlu0 %v222, 24
      %v1033 = vpop.permute.xlu0 %1032
      %1034 = vrot.lane.b32.xlu0 %v223, 24
      %v1035 = vpop.permute.xlu0 %1034
      %1036 = vrot.lane.b32.xlu0 %v225, 24
      %v1037 = vpop.permute.xlu0 %1036
      %1038 = vrot.lane.b32.xlu0 %v226, 24
      %v1039 = vpop.permute.xlu0 %1038
      %1072 = vrot.lane.b32.xlu0 %v289, 28
      %v1073 = vpop.permute.xlu0 %1072
      %1074 = vrot.lane.b32.xlu0 %v291, 28
      %v1075 = vpop.permute.xlu0 %1074
      %1076 = vrot.lane.b32.xlu0 %v294, 28
      %v1077 = vpop.permute.xlu0 %1076
      %1078 = vrot.lane.b32.xlu0 %v296, 28
      %v1079 = vpop.permute.xlu0 %1078
      %1080 = vrot.lane.b32.xlu0 %v299, 28
      %v1081 = vpop.permute.xlu0 %1080
      %1082 = vrot.lane.b32.xlu0 %v301, 28
      %v1083 = vpop.permute.xlu0 %1082
      %1084 = vrot.lane.b32.xlu0 %v304, 28
      %v1085 = vpop.permute.xlu0 %1084
      %1086 = vrot.lane.b32.xlu0 %v306, 28
      %v1087 = vpop.permute.xlu0 %1086
      %1088 = vrot.lane.b32.xlu0 %v309, 28
      %v1089 = vpop.permute.xlu0 %1088
      %1090 = vrot.lane.b32.xlu0 %v311, 28
      %v1091 = vpop.permute.xlu0 %1090
      %1092 = vrot.lane.b32.xlu0 %v314, 28
      %v1093 = vpop.permute.xlu0 %1092
      %1094 = vrot.lane.b32.xlu0 %v316, 28
      %v1095 = vpop.permute.xlu0 %1094
      %1096 = vrot.lane.b32.xlu0 %v319, 28
      %v1097 = vpop.permute.xlu0 %1096
      %1098 = vrot.lane.b32.xlu0 %v321, 28
      %v1099 = vpop.permute.xlu0 %1098
      %1100 = vrot.lane.b32.xlu0 %v324, 28
      %v1101 = vpop.permute.xlu0 %1100
      %1102 = vrot.lane.b32.xlu0 %v326, 28
      %v1103 = vpop.permute.xlu0 %1102
      %1104 = vrot.lane.b32.xlu0 %v329, 28
      %v1105 = vpop.permute.xlu0 %1104
      %1106 = vrot.lane.b32.xlu0 %v331, 28
      %v1107 = vpop.permute.xlu0 %1106
      %1108 = vrot.lane.b32.xlu0 %v334, 28
      %v1109 = vpop.permute.xlu0 %1108
      %1110 = vrot.lane.b32.xlu0 %v336, 28
      %v1111 = vpop.permute.xlu0 %1110
      %1112 = vrot.lane.b32.xlu0 %v339, 28
      %v1113 = vpop.permute.xlu0 %1112
      %1114 = vrot.lane.b32.xlu0 %v341, 28
      %v1115 = vpop.permute.xlu0 %1114
      %1116 = vrot.lane.b32.xlu0 %v344, 28
      %v1117 = vpop.permute.xlu0 %1116
      %1118 = vrot.lane.b32.xlu0 %v346, 28
      %v1119 = vpop.permute.xlu0 %1118
      %1120 = vrot.lane.b32.xlu0 %v349, 28
      %v1121 = vpop.permute.xlu0 %1120
      %1122 = vrot.lane.b32.xlu0 %v351, 28
      %v1123 = vpop.permute.xlu0 %1122
      %1124 = vrot.lane.b32.xlu0 %v354, 28
      %v1125 = vpop.permute.xlu0 %1124
      %1126 = vrot.lane.b32.xlu0 %v356, 28
      %v1127 = vpop.permute.xlu0 %1126
      %1128 = vrot.lane.b32.xlu0 %v443, 28
      %v1129 = vpop.permute.xlu0 %1128
      %1130 = vrot.lane.b32.xlu0 %v445, 28
      %v1131 = vpop.permute.xlu0 %1130
      %1132 = vrot.lane.b32.xlu0 %v488, 28
      %v1133 = vpop.permute.xlu0 %1132
      %1134 = vrot.lane.b32.xlu0 %v490, 28
      %v1135 = vpop.permute.xlu0 %1134
      %1168 = vrot.lane.b32.xlu0 %v370, 32
      %v1169 = vpop.permute.xlu0 %1168
      %1170 = vrot.lane.b32.xlu0 %v372, 32
      %v1171 = vpop.permute.xlu0 %1170
      %1172 = vrot.lane.b32.xlu0 %v375, 32
      %v1173 = vpop.permute.xlu0 %1172
      %1174 = vrot.lane.b32.xlu0 %v377, 32
      %v1175 = vpop.permute.xlu0 %1174
      %1176 = vrot.lane.b32.xlu0 %v380, 32
      %v1177 = vpop.permute.xlu0 %1176
      %1178 = vrot.lane.b32.xlu0 %v382, 32
      %v1179 = vpop.permute.xlu0 %1178
      %1180 = vrot.lane.b32.xlu0 %v385, 32
      %v1181 = vpop.permute.xlu0 %1180
      %1182 = vrot.lane.b32.xlu0 %v387, 32
      %v1183 = vpop.permute.xlu0 %1182
      %1184 = vrot.lane.b32.xlu0 %v390, 32
      %v1185 = vpop.permute.xlu0 %1184
      %1186 = vrot.lane.b32.xlu0 %v392, 32
      %v1187 = vpop.permute.xlu0 %1186
      %1188 = vrot.lane.b32.xlu0 %v395, 32
      %v1189 = vpop.permute.xlu0 %1188
      %1190 = vrot.lane.b32.xlu0 %v397, 32
      %v1191 = vpop.permute.xlu0 %1190
      %1192 = vrot.lane.b32.xlu0 %v400, 32
      %v1193 = vpop.permute.xlu0 %1192
      %1194 = vrot.lane.b32.xlu0 %v402, 32
      %v1195 = vpop.permute.xlu0 %1194
      %1196 = vrot.lane.b32.xlu0 %v405, 32
      %v1197 = vpop.permute.xlu0 %1196
      %1198 = vrot.lane.b32.xlu0 %v407, 32
      %v1199 = vpop.permute.xlu0 %1198
      %1200 = vrot.lane.b32.xlu0 %v410, 32
      %v1201 = vpop.permute.xlu0 %1200
      %1202 = vrot.lane.b32.xlu0 %v412, 32
      %v1203 = vpop.permute.xlu0 %1202
      %1204 = vrot.lane.b32.xlu0 %v415, 32
      %v1205 = vpop.permute.xlu0 %1204
      %1206 = vrot.lane.b32.xlu0 %v417, 32
      %v1207 = vpop.permute.xlu0 %1206
      %1208 = vrot.lane.b32.xlu0 %v420, 32
      %v1209 = vpop.permute.xlu0 %1208
      %1210 = vrot.lane.b32.xlu0 %v422, 32
      %v1211 = vpop.permute.xlu0 %1210
      %1212 = vrot.lane.b32.xlu0 %v425, 32
      %v1213 = vpop.permute.xlu0 %1212
      %1214 = vrot.lane.b32.xlu0 %v427, 32
      %v1215 = vpop.permute.xlu0 %1214
      %1216 = vrot.lane.b32.xlu0 %v430, 32
      %v1217 = vpop.permute.xlu0 %1216
      %1218 = vrot.lane.b32.xlu0 %v432, 32
      %v1219 = vpop.permute.xlu0 %1218
      %1220 = vrot.lane.b32.xlu0 %v435, 32
      %v1221 = vpop.permute.xlu0 %1220
      %1222 = vrot.lane.b32.xlu0 %v437, 32
      %v1223 = vpop.permute.xlu0 %1222
      %1224 = vrot.lane.b32.xlu0 %v480, 32
      %v1225 = vpop.permute.xlu0 %1224
      %1226 = vrot.lane.b32.xlu0 %v482, 32
      %v1227 = vpop.permute.xlu0 %1226
      %1228 = vrot.lane.b32.xlu0 %v493, 32
      %v1229 = vpop.permute.xlu0 %1228
      %1230 = vrot.lane.b32.xlu0 %v495, 32
      %v1231 = vpop.permute.xlu0 %1230
      %vm1264 = vcmask 31744
      %v1265 = vsel %vm1264, %v174, %v497
      %v1266 = vsel %vm1264, %v175, %v499
      %v1267 = vsel %vm1264, %v177, %v501
      %v1268 = vsel %vm1264, %v178, %v503
      %v1269 = vsel %vm1264, %v180, %v505
      %v1270 = vsel %vm1264, %v181, %v507
      %v1271 = vsel %vm1264, %v183, %v509
      %v1272 = vsel %vm1264, %v184, %v511
      %v1273 = vsel %vm1264, %v186, %v513
      %v1274 = vsel %vm1264, %v187, %v515
      %v1275 = vsel %vm1264, %v189, %v517
      %v1276 = vsel %vm1264, %v190, %v519
      %v1277 = vsel %vm1264, %v192, %v521
      %v1278 = vsel %vm1264, %v193, %v523
      %v1279 = vsel %vm1264, %v195, %v525
      %v1280 = vsel %vm1264, %v196, %v527
      %v1281 = vsel %vm1264, %v198, %v529
      %v1282 = vsel %vm1264, %v199, %v531
      %v1283 = vsel %vm1264, %v201, %v533
      %v1284 = vsel %vm1264, %v202, %v535
      %v1285 = vsel %vm1264, %v204, %v537
      %v1286 = vsel %vm1264, %v205, %v539
      %v1287 = vsel %vm1264, %v207, %v541
      %v1288 = vsel %vm1264, %v208, %v543
      %v1289 = vsel %vm1264, %v210, %v545
      %v1290 = vsel %vm1264, %v211, %v547
      %v1291 = vsel %vm1264, %v213, %v549
      %v1292 = vsel %vm1264, %v214, %v551
      %v1293 = vsel %vm1264, %v216, %v553
      %v1294 = vsel %vm1264, %v217, %v555
      %v1295 = vsel %vm1264, %v219, %v557
      %v1296 = vsel %vm1264, %v220, %v559
      %vm1297 = vcmask 64512
      %v1298 = vsel %vm1297, %v1265, %v593
      %v1299 = vsel %vm1297, %v1266, %v595
      %v1300 = vsel %vm1297, %v1267, %v597
      %v1301 = vsel %vm1297, %v1268, %v599
      %v1302 = vsel %vm1297, %v1269, %v601
      %v1303 = vsel %vm1297, %v1270, %v603
      %v1304 = vsel %vm1297, %v1271, %v605
      %v1305 = vsel %vm1297, %v1272, %v607
      %v1306 = vsel %vm1297, %v1273, %v609
      %v1307 = vsel %vm1297, %v1274, %v611
      %v1308 = vsel %vm1297, %v1275, %v613
      %v1309 = vsel %vm1297, %v1276, %v615
      %v1310 = vsel %vm1297, %v1277, %v617
      %v1311 = vsel %vm1297, %v1278, %v619
      %v1312 = vsel %vm1297, %v1279, %v621
      %v1313 = vsel %vm1297, %v1280, %v623
      %v1314 = vsel %vm1297, %v1281, %v625
      %v1315 = vsel %vm1297, %v1282, %v627
      %v1316 = vsel %vm1297, %v1283, %v629
      %v1317 = vsel %vm1297, %v1284, %v631
      %v1318 = vsel %vm1297, %v1285, %v633
      %v1319 = vsel %vm1297, %v1286, %v635
      %v1320 = vsel %vm1297, %v1287, %v637
      %v1321 = vsel %vm1297, %v1288, %v639
      %v1322 = vsel %vm1297, %v1289, %v641
      %v1323 = vsel %vm1297, %v1290, %v643
      %v1324 = vsel %vm1297, %v1291, %v645
      %v1325 = vsel %vm1297, %v1292, %v647
      %v1326 = vsel %vm1297, %v1293, %v649
      %v1327 = vsel %vm1297, %v1294, %v651
      %v1328 = vsel %vm1297, %v1295, %v653
      %v1329 = vsel %vm1297, %v1296, %v655
      %vm1330 = vcmask 97280
      %v1331 = vsel %vm1330, %v1298, %v689
      %v1332 = vsel %vm1330, %v1299, %v691
      %v1333 = vsel %vm1330, %v1300, %v693
      %v1334 = vsel %vm1330, %v1301, %v695
      %v1335 = vsel %vm1330, %v1302, %v697
      %v1336 = vsel %vm1330, %v1303, %v699
      %v1337 = vsel %vm1330, %v1304, %v701
      %v1338 = vsel %vm1330, %v1305, %v703
      %v1339 = vsel %vm1330, %v1306, %v705
      %v1340 = vsel %vm1330, %v1307, %v707
      %v1341 = vsel %vm1330, %v1308, %v709
      %v1342 = vsel %vm1330, %v1309, %v711
      %v1343 = vsel %vm1330, %v1310, %v713
      %v1344 = vsel %vm1330, %v1311, %v715
      %v1345 = vsel %vm1330, %v1312, %v717
      %v1346 = vsel %vm1330, %v1313, %v719
      %v1347 = vsel %vm1330, %v1314, %v721
      %v1348 = vsel %vm1330, %v1315, %v723
      %v1349 = vsel %vm1330, %v1316, %v725
      %v1350 = vsel %vm1330, %v1317, %v727
      %v1351 = vsel %vm1330, %v1318, %v729
      %v1352 = vsel %vm1330, %v1319, %v731
      %v1353 = vsel %vm1330, %v1320, %v733
      %v1354 = vsel %vm1330, %v1321, %v735
      %v1355 = vsel %vm1330, %v1322, %v737
      %v1356 = vsel %vm1330, %v1323, %v739
      %v1357 = vsel %vm1330, %v1324, %v741
      %v1358 = vsel %vm1330, %v1325, %v743
      %v1359 = vsel %vm1330, %v1326, %v745
      %v1360 = vsel %vm1330, %v1327, %v747
      %v1361 = vsel %vm1330, %v1328, %v749
      %v1362 = vsel %vm1330, %v1329, %v751
      %vm1363 = vcmask 130048
      %v1364 = vsel %vm1363, %v1331, %v785
      %v1365 = vsel %vm1363, %v1332, %v787
      %v1366 = vsel %vm1363, %v1333, %v789
      %v1367 = vsel %vm1363, %v1334, %v791
      %v1368 = vsel %vm1363, %v1335, %v793
      %v1369 = vsel %vm1363, %v1336, %v795
      %v1370 = vsel %vm1363, %v1337, %v797
      %v1371 = vsel %vm1363, %v1338, %v799
      %v1372 = vsel %vm1363, %v1339, %v801
      %v1373 = vsel %vm1363, %v1340, %v803
      %v1374 = vsel %vm1363, %v1341, %v805
      %v1375 = vsel %vm1363, %v1342, %v807
      %v1376 = vsel %vm1363, %v1343, %v809
      %v1377 = vsel %vm1363, %v1344, %v811
      %v1378 = vsel %vm1363, %v1345, %v813
      %v1379 = vsel %vm1363, %v1346, %v815
      %v1380 = vsel %vm1363, %v1347, %v817
      %v1381 = vsel %vm1363, %v1348, %v819
      %v1382 = vsel %vm1363, %v1349, %v821
      %v1383 = vsel %vm1363, %v1350, %v823
      %v1384 = vsel %vm1363, %v1351, %v825
      %v1385 = vsel %vm1363, %v1352, %v827
      %v1386 = vsel %vm1363, %v1353, %v829
      %v1387 = vsel %vm1363, %v1354, %v831
      %v1388 = vsel %vm1363, %v1355, %v833
      %v1389 = vsel %vm1363, %v1356, %v835
      %v1390 = vsel %vm1363, %v1357, %v837
      %v1391 = vsel %vm1363, %v1358, %v839
      %v1392 = vsel %vm1363, %v1359, %v841
      %v1393 = vsel %vm1363, %v1360, %v843
      %v1394 = vsel %vm1363, %v1361, %v845
      %v1395 = vsel %vm1363, %v1362, %v847
      %vm1396 = vcmask 162816
      %v1397 = vsel %vm1396, %v1364, %v881
      %v1398 = vsel %vm1396, %v1365, %v883
      %v1399 = vsel %vm1396, %v1366, %v885
      %v1400 = vsel %vm1396, %v1367, %v887
      %v1401 = vsel %vm1396, %v1368, %v889
      %v1402 = vsel %vm1396, %v1369, %v891
      %v1403 = vsel %vm1396, %v1370, %v893
      %v1404 = vsel %vm1396, %v1371, %v895
      %v1405 = vsel %vm1396, %v1372, %v897
      %v1406 = vsel %vm1396, %v1373, %v899
      %v1407 = vsel %vm1396, %v1374, %v901
      %v1408 = vsel %vm1396, %v1375, %v903
      %v1409 = vsel %vm1396, %v1376, %v905
      %v1410 = vsel %vm1396, %v1377, %v907
      %v1411 = vsel %vm1396, %v1378, %v909
      %v1412 = vsel %vm1396, %v1379, %v911
      %v1413 = vsel %vm1396, %v1380, %v913
      %v1414 = vsel %vm1396, %v1381, %v915
      %v1415 = vsel %vm1396, %v1382, %v917
      %v1416 = vsel %vm1396, %v1383, %v919
      %v1417 = vsel %vm1396, %v1384, %v921
      %v1418 = vsel %vm1396, %v1385, %v923
      %v1419 = vsel %vm1396, %v1386, %v925
      %v1420 = vsel %vm1396, %v1387, %v927
      %v1421 = vsel %vm1396, %v1388, %v929
      %v1422 = vsel %vm1396, %v1389, %v931
      %v1423 = vsel %vm1396, %v1390, %v933
      %v1424 = vsel %vm1396, %v1391, %v935
      %v1425 = vsel %vm1396, %v1392, %v937
      %v1426 = vsel %vm1396, %v1393, %v939
      %v1427 = vsel %vm1396, %v1394, %v941
      %v1428 = vsel %vm1396, %v1395, %v943
      %vm1429 = vcmask 195584
      %v1430 = vsel %vm1429, %v1397, %v977
      %v1431 = vsel %vm1429, %v1398, %v979
      %v1432 = vsel %vm1429, %v1399, %v981
      %v1433 = vsel %vm1429, %v1400, %v983
      %v1434 = vsel %vm1429, %v1401, %v985
      %v1435 = vsel %vm1429, %v1402, %v987
      %v1436 = vsel %vm1429, %v1403, %v989
      %v1437 = vsel %vm1429, %v1404, %v991
      %v1438 = vsel %vm1429, %v1405, %v993
      %v1439 = vsel %vm1429, %v1406, %v995
      %v1440 = vsel %vm1429, %v1407, %v997
      %v1441 = vsel %vm1429, %v1408, %v999
      %v1442 = vsel %vm1429, %v1409, %v1001
      %v1443 = vsel %vm1429, %v1410, %v1003
      %v1444 = vsel %vm1429, %v1411, %v1005
      %v1445 = vsel %vm1429, %v1412, %v1007
      %v1446 = vsel %vm1429, %v1413, %v1009
      %v1447 = vsel %vm1429, %v1414, %v1011
      %v1448 = vsel %vm1429, %v1415, %v1013
      %v1449 = vsel %vm1429, %v1416, %v1015
      %v1450 = vsel %vm1429, %v1417, %v1017
      %v1451 = vsel %vm1429, %v1418, %v1019
      %v1452 = vsel %vm1429, %v1419, %v1021
      %v1453 = vsel %vm1429, %v1420, %v1023
      %v1454 = vsel %vm1429, %v1421, %v1025
      %v1455 = vsel %vm1429, %v1422, %v1027
      %v1456 = vsel %vm1429, %v1423, %v1029
      %v1457 = vsel %vm1429, %v1424, %v1031
      %v1458 = vsel %vm1429, %v1425, %v1033
      %v1459 = vsel %vm1429, %v1426, %v1035
      %v1460 = vsel %vm1429, %v1427, %v1037
      %v1461 = vsel %vm1429, %v1428, %v1039
      %vm1462 = vcmask 228352
      %v1463 = vsel %vm1462, %v1430, %v1073
      %v1464 = vsel %vm1462, %v1431, %v1075
      %v1465 = vsel %vm1462, %v1432, %v1077
      %v1466 = vsel %vm1462, %v1433, %v1079
      %v1467 = vsel %vm1462, %v1434, %v1081
      %v1468 = vsel %vm1462, %v1435, %v1083
      %v1469 = vsel %vm1462, %v1436, %v1085
      %v1470 = vsel %vm1462, %v1437, %v1087
      %v1471 = vsel %vm1462, %v1438, %v1089
      %v1472 = vsel %vm1462, %v1439, %v1091
      %v1473 = vsel %vm1462, %v1440, %v1093
      %v1474 = vsel %vm1462, %v1441, %v1095
      %v1475 = vsel %vm1462, %v1442, %v1097
      %v1476 = vsel %vm1462, %v1443, %v1099
      %v1477 = vsel %vm1462, %v1444, %v1101
      %v1478 = vsel %vm1462, %v1445, %v1103
      %v1479 = vsel %vm1462, %v1446, %v1105
      %v1480 = vsel %vm1462, %v1447, %v1107
      %v1481 = vsel %vm1462, %v1448, %v1109
      %v1482 = vsel %vm1462, %v1449, %v1111
      %v1483 = vsel %vm1462, %v1450, %v1113
      %v1484 = vsel %vm1462, %v1451, %v1115
      %v1485 = vsel %vm1462, %v1452, %v1117
      %v1486 = vsel %vm1462, %v1453, %v1119
      %v1487 = vsel %vm1462, %v1454, %v1121
      %v1488 = vsel %vm1462, %v1455, %v1123
      %v1489 = vsel %vm1462, %v1456, %v1125
      %v1490 = vsel %vm1462, %v1457, %v1127
      %v1491 = vsel %vm1462, %v1458, %v1129
      %v1492 = vsel %vm1462, %v1459, %v1131
      %v1493 = vsel %vm1462, %v1460, %v1133
      %v1494 = vsel %vm1462, %v1461, %v1135
      %vm1495 = vcmask 261120
      %v1496 = vsel %vm1495, %v1463, %v1169
      %v1497 = vsel %vm1495, %v1464, %v1171
      %v1498 = vsel %vm1495, %v1465, %v1173
      %v1499 = vsel %vm1495, %v1466, %v1175
      %v1500 = vsel %vm1495, %v1467, %v1177
      %v1501 = vsel %vm1495, %v1468, %v1179
      %v1502 = vsel %vm1495, %v1469, %v1181
      %v1503 = vsel %vm1495, %v1470, %v1183
      %v1504 = vsel %vm1495, %v1471, %v1185
      %v1505 = vsel %vm1495, %v1472, %v1187
      %v1506 = vsel %vm1495, %v1473, %v1189
      %v1507 = vsel %vm1495, %v1474, %v1191
      %v1508 = vsel %vm1495, %v1475, %v1193
      %v1509 = vsel %vm1495, %v1476, %v1195
      %v1510 = vsel %vm1495, %v1477, %v1197
      %v1511 = vsel %vm1495, %v1478, %v1199
      %v1512 = vsel %vm1495, %v1479, %v1201
      %v1513 = vsel %vm1495, %v1480, %v1203
      %v1514 = vsel %vm1495, %v1481, %v1205
      %v1515 = vsel %vm1495, %v1482, %v1207
      %v1516 = vsel %vm1495, %v1483, %v1209
      %v1517 = vsel %vm1495, %v1484, %v1211
      %v1518 = vsel %vm1495, %v1485, %v1213
      %v1519 = vsel %vm1495, %v1486, %v1215
      %v1520 = vsel %vm1495, %v1487, %v1217
      %v1521 = vsel %vm1495, %v1488, %v1219
      %v1522 = vsel %vm1495, %v1489, %v1221
      %v1523 = vsel %vm1495, %v1490, %v1223
      %v1524 = vsel %vm1495, %v1491, %v1225
      %v1525 = vsel %vm1495, %v1492, %v1227
      %v1526 = vsel %vm1495, %v1493, %v1229
      %v1527 = vsel %vm1495, %v1494, %v1231
      %v1528 = vld [vmem:[%s1] sm:$0xff]
      %v1529 = vld [vmem:[%s1 + $0x8] sm:$0xff]
      %v1530 = vld [vmem:[%s1 + $0x10] sm:$0xff]
      %v1531 = vld [vmem:[%s1 + $0x18] sm:$0xff]
      %v1532 = vld [vmem:[%s1 + $0x20] sm:$0xf]
      %vm1533 = vcmask 293888
      %v1535 = vsel %vm1533, %v1496, 0
      %v1538 = vsel %vm1533, %v1497, 0
      %v1541 = vsel %vm1533, %v1498, 0
      %v1544 = vsel %vm1533, %v1499, 0
      %v1547 = vsel %vm1533, %v1500, 0
      %v1550 = vsel %vm1533, %v1501, 0
      %v1553 = vsel %vm1533, %v1502, 0
      %v1556 = vsel %vm1533, %v1503, 0
      %v1559 = vsel %vm1533, %v1504, 0
      %v1562 = vsel %vm1533, %v1505, 0
      %v1565 = vsel %vm1533, %v1506, 0
      %v1568 = vsel %vm1533, %v1507, 0
      %v1571 = vsel %vm1533, %v1508, 0
      %v1574 = vsel %vm1533, %v1509, 0
      %v1577 = vsel %vm1533, %v1510, 0
      %v1580 = vsel %vm1533, %v1511, 0
      %v1583 = vsel %vm1533, %v1512, 0
      %v1586 = vsel %vm1533, %v1513, 0
      %v1589 = vsel %vm1533, %v1514, 0
      %v1592 = vsel %vm1533, %v1515, 0
      %v1595 = vsel %vm1533, %v1516, 0
      %v1598 = vsel %vm1533, %v1517, 0
      %v1601 = vsel %vm1533, %v1518, 0
      %v1604 = vsel %vm1533, %v1519, 0
      %v1607 = vsel %vm1533, %v1520, 0
      %v1610 = vsel %vm1533, %v1521, 0
      %v1613 = vsel %vm1533, %v1522, 0
      %v1616 = vsel %vm1533, %v1523, 0
      %v1619 = vsel %vm1533, %v1524, 0
      %v1622 = vsel %vm1533, %v1525, 0
      %v1625 = vsel %vm1533, %v1526, 0
      %v1628 = vsel %vm1533, %v1527, 0
      %vm1630 = vcmask 1043456
      %v1632 = vsel %vm1630, %v1532, 0
      %1634 = vmatpush.msra.mxu0 0.0
      %1635 = vmatpush.msra.mxu0 0.0
      %1636 = vmatpush.msra.mxu0 0.0
      %1637 = vmatpush.msra.mxu0 0.0
      %1638 = vmatpush.msra.mxu0 0.0
      %1639 = vmatpush.msra.mxu0 0.0
      %1640 = vmatpush.msra.mxu0 0.0
      %1641 = vmatpush.msra.mxu0 0.0
      %1642 = vmatpush.msra.mxu0 0.0
      %1643 = vmatpush.msra.mxu0 0.0
      %1644 = vmatpush.msra.mxu0 0.0
      %1645 = vmatpush.msra.mxu0 %v1632
      %1646 = vmatpush.msra.mxu0 %v1531
      %1647 = vmatpush.msra.mxu0 %v1530
      %1648 = vmatpush.msra.mxu0 %v1529
      %1649 = vmatpush.msra.mxu0 %v1528
      %1650 = vmatmul.f32.gmra.mxu0 %v1535
      %v1651 = vpop.f32.mrf.mxu0
      %v1652 = vadd.f32 0.0, %v1651
      %1653 = vmatmul.f32.gmra.mxu0 %v1538
      %v1654 = vpop.f32.mrf.mxu0
      %v1655 = vadd.f32 0.0, %v1654
      %1656 = vmatmul.f32.gmra.mxu0 %v1541
      %v1657 = vpop.f32.mrf.mxu0
      %v1658 = vadd.f32 0.0, %v1657
      %1659 = vmatmul.f32.gmra.mxu0 %v1544
      %v1660 = vpop.f32.mrf.mxu0
      %v1661 = vadd.f32 0.0, %v1660
      %1662 = vmatmul.f32.gmra.mxu0 %v1547
      %v1663 = vpop.f32.mrf.mxu0
      %v1664 = vadd.f32 0.0, %v1663
      %1665 = vmatmul.f32.gmra.mxu0 %v1550
      %v1666 = vpop.f32.mrf.mxu0
      %v1667 = vadd.f32 0.0, %v1666
      %1668 = vmatmul.f32.gmra.mxu0 %v1553
      %v1669 = vpop.f32.mrf.mxu0
      %v1670 = vadd.f32 0.0, %v1669
      %1671 = vmatmul.f32.gmra.mxu0 %v1556
      %v1672 = vpop.f32.mrf.mxu0
      %v1673 = vadd.f32 0.0, %v1672
      %1674 = vmatmul.f32.gmra.mxu0 %v1559
      %v1675 = vpop.f32.mrf.mxu0
      %v1676 = vadd.f32 0.0, %v1675
      %1677 = vmatmul.f32.gmra.mxu0 %v1562
      %v1678 = vpop.f32.mrf.mxu0
      %v1679 = vadd.f32 0.0, %v1678
      %1680 = vmatmul.f32.gmra.mxu0 %v1565
      %v1681 = vpop.f32.mrf.mxu0
      %v1682 = vadd.f32 0.0, %v1681
      %1683 = vmatmul.f32.gmra.mxu0 %v1568
      %v1684 = vpop.f32.mrf.mxu0
      %v1685 = vadd.f32 0.0, %v1684
      %1686 = vmatmul.f32.gmra.mxu0 %v1571
      %v1687 = vpop.f32.mrf.mxu0
      %v1688 = vadd.f32 0.0, %v1687
      %1689 = vmatmul.f32.gmra.mxu0 %v1574
      %v1690 = vpop.f32.mrf.mxu0
      %v1691 = vadd.f32 0.0, %v1690
      %1692 = vmatmul.f32.gmra.mxu0 %v1577
      %v1693 = vpop.f32.mrf.mxu0
      %v1694 = vadd.f32 0.0, %v1693
      %1695 = vmatmul.f32.gmra.mxu0 %v1580
      %v1696 = vpop.f32.mrf.mxu0
      %v1697 = vadd.f32 0.0, %v1696
      %1698 = vmatmul.f32.gmra.mxu0 %v1583
      %v1699 = vpop.f32.mrf.mxu0
      %v1700 = vadd.f32 0.0, %v1699
      %1701 = vmatmul.f32.gmra.mxu0 %v1586
      %v1702 = vpop.f32.mrf.mxu0
      %v1703 = vadd.f32 0.0, %v1702
      %1704 = vmatmul.f32.gmra.mxu0 %v1589
      %v1705 = vpop.f32.mrf.mxu0
      %v1706 = vadd.f32 0.0, %v1705
      %1707 = vmatmul.f32.gmra.mxu0 %v1592
      %v1708 = vpop.f32.mrf.mxu0
      %v1709 = vadd.f32 0.0, %v1708
      %1710 = vmatmul.f32.gmra.mxu0 %v1595
      %v1711 = vpop.f32.mrf.mxu0
      %v1712 = vadd.f32 0.0, %v1711
      %1713 = vmatmul.f32.gmra.mxu0 %v1598
      %v1714 = vpop.f32.mrf.mxu0
      %v1715 = vadd.f32 0.0, %v1714
      %1716 = vmatmul.f32.gmra.mxu0 %v1601
      %v1717 = vpop.f32.mrf.mxu0
      %v1718 = vadd.f32 0.0, %v1717
      %1719 = vmatmul.f32.gmra.mxu0 %v1604
      %v1720 = vpop.f32.mrf.mxu0
      %v1721 = vadd.f32 0.0, %v1720
      %1722 = vmatmul.f32.gmra.mxu0 %v1607
      %v1723 = vpop.f32.mrf.mxu0
      %v1724 = vadd.f32 0.0, %v1723
      %1725 = vmatmul.f32.gmra.mxu0 %v1610
      %v1726 = vpop.f32.mrf.mxu0
      %v1727 = vadd.f32 0.0, %v1726
      %1728 = vmatmul.f32.gmra.mxu0 %v1613
      %v1729 = vpop.f32.mrf.mxu0
      %v1730 = vadd.f32 0.0, %v1729
      %1731 = vmatmul.f32.gmra.mxu0 %v1616
      %v1732 = vpop.f32.mrf.mxu0
      %v1733 = vadd.f32 0.0, %v1732
      %1734 = vmatmul.f32.gmra.mxu0 %v1619
      %v1735 = vpop.f32.mrf.mxu0
      %v1736 = vadd.f32 0.0, %v1735
      %1737 = vmatmul.f32.gmra.mxu0 %v1622
      %v1738 = vpop.f32.mrf.mxu0
      %v1739 = vadd.f32 0.0, %v1738
      %1740 = vmatmul.f32.gmra.mxu0 %v1625
      %v1741 = vpop.f32.mrf.mxu0
      %v1742 = vadd.f32 0.0, %v1741
      %1743 = vmatmul.f32.gmra.mxu0 %v1628
      %v1744 = vpop.f32.mrf.mxu0
      %v1745 = vadd.f32 0.0, %v1744
      %1746 = vdwg.mxu0
      %v1747 = vld [vmem:[#allocation2] sm:$0x1]
      %v1748 = vmax.f32 %v1652, 0.0
      %v1749 = vmax.f32 %v1655, 0.0
      %v1750 = vmax.f32 %v1658, 0.0
      %v1751 = vmax.f32 %v1661, 0.0
      %v1752 = vmax.f32 %v1664, 0.0
      %v1753 = vmax.f32 %v1667, 0.0
      %v1754 = vmax.f32 %v1670, 0.0
      %v1755 = vmax.f32 %v1673, 0.0
      %v1756 = vmax.f32 %v1676, 0.0
      %v1757 = vmax.f32 %v1679, 0.0
      %v1758 = vmax.f32 %v1682, 0.0
      %v1759 = vmax.f32 %v1685, 0.0
      %v1760 = vmax.f32 %v1688, 0.0
      %v1761 = vmax.f32 %v1691, 0.0
      %v1762 = vmax.f32 %v1694, 0.0
      %v1763 = vmax.f32 %v1697, 0.0
      %v1764 = vmax.f32 %v1700, 0.0
      %v1765 = vmax.f32 %v1703, 0.0
      %v1766 = vmax.f32 %v1706, 0.0
      %v1767 = vmax.f32 %v1709, 0.0
      %v1768 = vmax.f32 %v1712, 0.0
      %v1769 = vmax.f32 %v1715, 0.0
      %v1770 = vmax.f32 %v1718, 0.0
      %v1771 = vmax.f32 %v1721, 0.0
      %v1772 = vmax.f32 %v1724, 0.0
      %v1773 = vmax.f32 %v1727, 0.0
      %v1774 = vmax.f32 %v1730, 0.0
      %v1775 = vmax.f32 %v1733, 0.0
      %v1776 = vmax.f32 %v1736, 0.0
      %v1777 = vmax.f32 %v1739, 0.0
      %v1778 = vmax.f32 %v1742, 0.0
      %v1779 = vmax.f32 %v1745, 0.0
      %v1780 = vmin.f32 %v1652, 0.0
      %v1781 = vmin.f32 %v1655, 0.0
      %v1782 = vmin.f32 %v1658, 0.0
      %v1783 = vmin.f32 %v1661, 0.0
      %v1784 = vmin.f32 %v1664, 0.0
      %v1785 = vmin.f32 %v1667, 0.0
      %v1786 = vmin.f32 %v1670, 0.0
      %v1787 = vmin.f32 %v1673, 0.0
      %v1788 = vmin.f32 %v1676, 0.0
      %v1789 = vmin.f32 %v1679, 0.0
      %v1790 = vmin.f32 %v1682, 0.0
      %v1791 = vmin.f32 %v1685, 0.0
      %v1792 = vmin.f32 %v1688, 0.0
      %v1793 = vmin.f32 %v1691, 0.0
      %v1794 = vmin.f32 %v1694, 0.0
      %v1795 = vmin.f32 %v1697, 0.0
      %v1796 = vmin.f32 %v1700, 0.0
      %v1797 = vmin.f32 %v1703, 0.0
      %v1798 = vmin.f32 %v1706, 0.0
      %v1799 = vmin.f32 %v1709, 0.0
      %v1800 = vmin.f32 %v1712, 0.0
      %v1801 = vmin.f32 %v1715, 0.0
      %v1802 = vmin.f32 %v1718, 0.0
      %v1803 = vmin.f32 %v1721, 0.0
      %v1804 = vmin.f32 %v1724, 0.0
      %v1805 = vmin.f32 %v1727, 0.0
      %v1806 = vmin.f32 %v1730, 0.0
      %v1807 = vmin.f32 %v1733, 0.0
      %v1808 = vmin.f32 %v1736, 0.0
      %v1809 = vmin.f32 %v1739, 0.0
      %v1810 = vmin.f32 %v1742, 0.0
      %v1811 = vmin.f32 %v1745, 0.0
      %v1813 = vperm.slane %v1747, 0
      %1814 = vset.pattern.permute.xlu0 0
      %1815 = vperm.xlu0 %1814, %v1813
      %v1816 = vpop.permute.xlu0 %1815
      %v1818 = vmul.f32 %v1816, %v1780
      %v1819 = vmul.f32 %v1816, %v1781
      %v1820 = vmul.f32 %v1816, %v1782
      %v1821 = vmul.f32 %v1816, %v1783
      %v1822 = vmul.f32 %v1816, %v1784
      %v1823 = vmul.f32 %v1816, %v1785
      %v1824 = vmul.f32 %v1816, %v1786
      %v1825 = vmul.f32 %v1816, %v1787
      %v1826 = vmul.f32 %v1816, %v1788
      %v1827 = vmul.f32 %v1816, %v1789
      %v1828 = vmul.f32 %v1816, %v1790
      %v1829 = vmul.f32 %v1816, %v1791
      %v1830 = vmul.f32 %v1816, %v1792
      %v1831 = vmul.f32 %v1816, %v1793
      %v1832 = vmul.f32 %v1816, %v1794
      %v1833 = vmul.f32 %v1816, %v1795
      %v1834 = vmul.f32 %v1816, %v1796
      %v1835 = vmul.f32 %v1816, %v1797
      %v1836 = vmul.f32 %v1816, %v1798
      %v1837 = vmul.f32 %v1816, %v1799
      %v1838 = vmul.f32 %v1816, %v1800
      %v1839 = vmul.f32 %v1816, %v1801
      %v1840 = vmul.f32 %v1816, %v1802
      %v1841 = vmul.f32 %v1816, %v1803
      %v1842 = vmul.f32 %v1816, %v1804
      %v1843 = vmul.f32 %v1816, %v1805
      %v1844 = vmul.f32 %v1816, %v1806
      %v1845 = vmul.f32 %v1816, %v1807
      %v1846 = vmul.f32 %v1816, %v1808
      %v1847 = vmul.f32 %v1816, %v1809
      %v1848 = vmul.f32 %v1816, %v1810
      %v1849 = vmul.f32 %v1816, %v1811
      %v1850 = vadd.f32 %v1748, %v1818
      %v1851 = vadd.f32 %v1749, %v1819
      %v1852 = vadd.f32 %v1750, %v1820
      %v1853 = vadd.f32 %v1751, %v1821
      %v1854 = vadd.f32 %v1752, %v1822
      %v1855 = vadd.f32 %v1753, %v1823
      %v1856 = vadd.f32 %v1754, %v1824
      %v1857 = vadd.f32 %v1755, %v1825
      %v1858 = vadd.f32 %v1756, %v1826
      %v1859 = vadd.f32 %v1757, %v1827
      %v1860 = vadd.f32 %v1758, %v1828
      %v1861 = vadd.f32 %v1759, %v1829
      %v1862 = vadd.f32 %v1760, %v1830
      %v1863 = vadd.f32 %v1761, %v1831
      %v1864 = vadd.f32 %v1762, %v1832
      %v1865 = vadd.f32 %v1763, %v1833
      %v1866 = vadd.f32 %v1764, %v1834
      %v1867 = vadd.f32 %v1765, %v1835
      %v1868 = vadd.f32 %v1766, %v1836
      %v1869 = vadd.f32 %v1767, %v1837
      %v1870 = vadd.f32 %v1768, %v1838
      %v1871 = vadd.f32 %v1769, %v1839
      %v1872 = vadd.f32 %v1770, %v1840
      %v1873 = vadd.f32 %v1771, %v1841
      %v1874 = vadd.f32 %v1772, %v1842
      %v1875 = vadd.f32 %v1773, %v1843
      %v1876 = vadd.f32 %v1774, %v1844
      %v1877 = vadd.f32 %v1775, %v1845
      %v1878 = vadd.f32 %v1776, %v1846
      %v1879 = vadd.f32 %v1777, %v1847
      %v1880 = vadd.f32 %v1778, %v1848
      %v1881 = vadd.f32 %v1779, %v1849
      %1914 = vrot.lane.b32.xlu0 %v1850, 4
      %v1915 = vpop.permute.xlu0 %1914
      %1916 = vrot.lane.b32.xlu0 %v1851, 4
      %v1917 = vpop.permute.xlu0 %1916
      %1918 = vrot.lane.b32.xlu0 %v1852, 4
      %v1919 = vpop.permute.xlu0 %1918
      %1920 = vrot.lane.b32.xlu0 %v1853, 4
      %v1921 = vpop.permute.xlu0 %1920
      %1922 = vrot.lane.b32.xlu0 %v1854, 4
      %v1923 = vpop.permute.xlu0 %1922
      %1924 = vrot.lane.b32.xlu0 %v1855, 4
      %v1925 = vpop.permute.xlu0 %1924
      %1926 = vrot.lane.b32.xlu0 %v1856, 4
      %v1927 = vpop.permute.xlu0 %1926
      %1928 = vrot.lane.b32.xlu0 %v1857, 4
      %v1929 = vpop.permute.xlu0 %1928
      %1930 = vrot.lane.b32.xlu0 %v1858, 4
      %v1931 = vpop.permute.xlu0 %1930
      %1932 = vrot.lane.b32.xlu0 %v1859, 4
      %v1933 = vpop.permute.xlu0 %1932
      %1934 = vrot.lane.b32.xlu0 %v1860, 4
      %v1935 = vpop.permute.xlu0 %1934
      %1936 = vrot.lane.b32.xlu0 %v1861, 4
      %v1937 = vpop.permute.xlu0 %1936
      %1938 = vrot.lane.b32.xlu0 %v1862, 4
      %v1939 = vpop.permute.xlu0 %1938
      %1940 = vrot.lane.b32.xlu0 %v1863, 4
      %v1941 = vpop.permute.xlu0 %1940
      %1942 = vrot.lane.b32.xlu0 %v1864, 4
      %v1943 = vpop.permute.xlu0 %1942
      %1944 = vrot.lane.b32.xlu0 %v1865, 4
      %v1945 = vpop.permute.xlu0 %1944
      %1946 = vrot.lane.b32.xlu0 %v1866, 4
      %v1947 = vpop.permute.xlu0 %1946
      %1948 = vrot.lane.b32.xlu0 %v1867, 4
      %v1949 = vpop.permute.xlu0 %1948
      %1950 = vrot.lane.b32.xlu0 %v1868, 4
      %v1951 = vpop.permute.xlu0 %1950
      %1952 = vrot.lane.b32.xlu0 %v1869, 4
      %v1953 = vpop.permute.xlu0 %1952
      %1954 = vrot.lane.b32.xlu0 %v1870, 4
      %v1955 = vpop.permute.xlu0 %1954
      %1956 = vrot.lane.b32.xlu0 %v1871, 4
      %v1957 = vpop.permute.xlu0 %1956
      %1958 = vrot.lane.b32.xlu0 %v1872, 4
      %v1959 = vpop.permute.xlu0 %1958
      %1960 = vrot.lane.b32.xlu0 %v1873, 4
      %v1961 = vpop.permute.xlu0 %1960
      %1962 = vrot.lane.b32.xlu0 %v1874, 4
      %v1963 = vpop.permute.xlu0 %1962
      %1964 = vrot.lane.b32.xlu0 %v1875, 4
      %v1965 = vpop.permute.xlu0 %1964
      %1966 = vrot.lane.b32.xlu0 %v1876, 4
      %v1967 = vpop.permute.xlu0 %1966
      %1968 = vrot.lane.b32.xlu0 %v1877, 4
      %v1969 = vpop.permute.xlu0 %1968
      %1970 = vrot.lane.b32.xlu0 %v1878, 4
      %v1971 = vpop.permute.xlu0 %1970
      %1972 = vrot.lane.b32.xlu0 %v1879, 4
      %v1973 = vpop.permute.xlu0 %1972
      %1974 = vrot.lane.b32.xlu0 %v1880, 4
      %v1975 = vpop.permute.xlu0 %1974
      %1976 = vrot.lane.b32.xlu0 %v1881, 4
      %v1977 = vpop.permute.xlu0 %1976
      %v2010 = vsel %vm1264, %v284, %v1915
      %v2011 = vsel %vm1264, %v286, %v1917
      %v2012 = vsel %vm1264, %v289, %v1919
      %v2013 = vsel %vm1264, %v291, %v1921
      %v2014 = vsel %vm1264, %v294, %v1923
      %v2015 = vsel %vm1264, %v296, %v1925
      %v2016 = vsel %vm1264, %v299, %v1927
      %v2017 = vsel %vm1264, %v301, %v1929
      %v2018 = vsel %vm1264, %v304, %v1931
      %v2019 = vsel %vm1264, %v306, %v1933
      %v2020 = vsel %vm1264, %v309, %v1935
      %v2021 = vsel %vm1264, %v311, %v1937
      %v2022 = vsel %vm1264, %v314, %v1939
      %v2023 = vsel %vm1264, %v316, %v1941
      %v2024 = vsel %vm1264, %v319, %v1943
      %v2025 = vsel %vm1264, %v321, %v1945
      %v2026 = vsel %vm1264, %v324, %v1947
      %v2027 = vsel %vm1264, %v326, %v1949
      %v2028 = vsel %vm1264, %v329, %v1951
      %v2029 = vsel %vm1264, %v331, %v1953
      %v2030 = vsel %vm1264, %v334, %v1955
      %v2031 = vsel %vm1264, %v336, %v1957
      %v2032 = vsel %vm1264, %v339, %v1959
      %v2033 = vsel %vm1264, %v341, %v1961
      %v2034 = vsel %vm1264, %v344, %v1963
      %v2035 = vsel %vm1264, %v346, %v1965
      %v2036 = vsel %vm1264, %v349, %v1967
      %v2037 = vsel %vm1264, %v351, %v1969
      %v2038 = vsel %vm1264, %v354, %v1971
      %v2039 = vsel %vm1264, %v356, %v1973
      %v2040 = vsel %vm1264, %v443, %v1975
      %v2041 = vsel %vm1264, %v445, %v1977
      %2042 = vst.msk [vmem:[%s172] sm:$0xff] %vm1330, %v2010
      %2043 = vst.msk [vmem:[%s172 + $0x8] sm:$0xff] %vm1330, %v2011
      %2044 = vst.msk [vmem:[%s172 + $0x10] sm:$0xff] %vm1330, %v2012
      %2045 = vst.msk [vmem:[%s172 + $0x18] sm:$0xff] %vm1330, %v2013
      %2046 = vst.msk [vmem:[%s172 + $0x20] sm:$0xff] %vm1330, %v2014
      %2047 = vst.msk [vmem:[%s172 + $0x28] sm:$0xff] %vm1330, %v2015
      %2048 = vst.msk [vmem:[%s172 + $0x30] sm:$0xff] %vm1330, %v2016
      %2049 = vst.msk [vmem:[%s172 + $0x38] sm:$0xff] %vm1330, %v2017
      %2050 = vst.msk [vmem:[%s172 + $0x40] sm:$0xff] %vm1330, %v2018
      %2051 = vst.msk [vmem:[%s172 + $0x48] sm:$0xff] %vm1330, %v2019
      %2052 = vst.msk [vmem:[%s172 + $0x50] sm:$0xff] %vm1330, %v2020
      %2053 = vst.msk [vmem:[%s172 + $0x58] sm:$0xff] %vm1330, %v2021
      %2054 = vst.msk [vmem:[%s172 + $0x60] sm:$0xff] %vm1330, %v2022
      %2055 = vst.msk [vmem:[%s172 + $0x68] sm:$0xff] %vm1330, %v2023
      %2056 = vst.msk [vmem:[%s172 + $0x70] sm:$0xff] %vm1330, %v2024
      %2057 = vst.msk [vmem:[%s172 + $0x78] sm:$0xff] %vm1330, %v2025
      %2058 = vst.msk [vmem:[%s172 + $0x80] sm:$0xff] %vm1330, %v2026
      %2059 = vst.msk [vmem:[%s172 + $0x88] sm:$0xff] %vm1330, %v2027
      %2060 = vst.msk [vmem:[%s172 + $0x90] sm:$0xff] %vm1330, %v2028
      %2061 = vst.msk [vmem:[%s172 + $0x98] sm:$0xff] %vm1330, %v2029
      %2062 = vst.msk [vmem:[%s172 + $0xa0] sm:$0xff] %vm1330, %v2030
      %2063 = vst.msk [vmem:[%s172 + $0xa8] sm:$0xff] %vm1330, %v2031
      %2064 = vst.msk [vmem:[%s172 + $0xb0] sm:$0xff] %vm1330, %v2032
      %2065 = vst.msk [vmem:[%s172 + $0xb8] sm:$0xff] %vm1330, %v2033
      %2066 = vst.msk [vmem:[%s172 + $0xc0] sm:$0xff] %vm1330, %v2034
      %2067 = vst.msk [vmem:[%s172 + $0xc8] sm:$0xff] %vm1330, %v2035
      %2068 = vst.msk [vmem:[%s172 + $0xd0] sm:$0xff] %vm1330, %v2036
      %2069 = vst.msk [vmem:[%s172 + $0xd8] sm:$0xff] %vm1330, %v2037
      %2070 = vst.msk [vmem:[%s172 + $0xe0] sm:$0xff] %vm1330, %v2038
      %2071 = vst.msk [vmem:[%s172 + $0xe8] sm:$0xff] %vm1330, %v2039
      %2072 = vst.msk [vmem:[%s172 + $0xf0] sm:$0xff] %vm1330, %v2040
      %2073 = vst.msk [vmem:[%s172 + $0xf8] sm:$0xff] %vm1330, %v2041
      %s2074 = smul.u32 32, %s16
      %p2075 = scmp.lt.s32.totalorder %s2074, 63
      %s2076 = scalar_select %p2075, %s2074, 63
      %s2077 = smul.addr %s2076, 8
      %s2078 = scalar_lea.vmem %s3, %s2077
      // Predicated region
      $region33: #{make_dense.1} parent=31 // pred_check
        %p2079 = pneg %p102
      $region34: #{make_dense.1} parent=31 // pred_check_branch
        %2081 = sbr.rel (%p2079) target = $region36
      $region35: #{make_dense.1} parent=31 // pred_region
        %s2082 = smul.u32 32, %s16
      $region36: #{make_dense.1} parent=31 // pred_fallthru
        _
    $region32: #{make_dense.1} parent=5 // pred_fallthru
      _
    %p2083 = scmp.le.s32.totalorder 2, %s11
    // Predicated region
    $region37: #{make_dense.1} parent=5 // pred_check
      %p2084 = pneg %p2083
    $region38: #{make_dense.1} parent=5 // pred_check_branch
      %2086 = sbr.rel (%p2084) target = $region40
    $region39: #{make_dense.1} parent=5 // pred_region
      %s2087 = ssub.s32 %s11, 2
      // Predicated region
      $region41: #{make_dense.1} parent=39 // pred_check
        %p2088 = pneg %p108
      $region42: #{make_dense.1} parent=39 // pred_check_branch
        %2090 = sbr.rel (%p2088) target = $region44
      $region43: #{make_dense.1} parent=39 // pred_region
        %s2091 = smul.u32 32, %s17
        %p2092 = scmp.lt.s32.totalorder %s2091, 63
        %s2093 = scalar_select %p2092, %s2091, 63
        %s2094 = smul.addr %s2093, 8
        %s2095 = scalar_lea.vmem %s3, %s2094
      $region44: #{make_dense.1} parent=39 // pred_fallthru
        _
    $region40: #{make_dense.1} parent=5 // pred_fallthru
      _
  $region6: #{make_dense.1} parent=0 // loop_footer
    %s15 = sadd.s32 1, %s11
  $region7: #{make_dense.1} parent=0 // loop_footer_branch
    %10 = sbr.rel target = $region3
  $region8: #{make_dense.1} parent=0 // loop_exit
    _

</llo_original>
